<compile_context>
chip_gen: v7x
topology: tpu7x:2x2x1
jax: 0.10.0
libtpu: 0.0.40
codegen_flags: <defaults>
</compile_context>

<pallas_src>
import math
import functools

import jax
import jax.numpy as jnp
from jax.experimental import pallas as pl
from jax.experimental.pallas import tpu as pltpu

# ---- model hyper-parameters (small, synthetic) -------------------------------
B = 2           # batch size
S = 16          # max_wordpiece_len (subword sequence length)
L = 8           # max_sent_len (number of original words)
H = 32          # hidden size
NH = 4          # attention heads
HD = H // NH    # head dim
F = 64          # FFN intermediate size
V = 64          # vocab size
EPS = 1e-12     # BERT layernorm eps
SCALE = 1.0 / math.sqrt(HD)

BS = B * S      # 32  flattened token rows
BL = B * L      # 16  flattened word rows
H3 = 3 * H      # 96  fused qkv width
PK = NH * BS    # 128 packed (head, key) lane width


# ==============================================================================
# Fused kernel: 1 transformer encoder layer + word gather, single invocation
# ==============================================================================
def fused_kernel(x_ref, amask_ref, hmask_ref, onehot_ref,
                 wqkv_ref, wo_ref, w1_ref, w2_ref, vecs_ref, out_ref):
    x = x_ref[...]                                    # (BS, H) f32
    xb = x.astype(jnp.bfloat16)

    # packed bias / layernorm vectors: one DMA, row slices inside
    vecs = vecs_ref[...]                              # (8, 3H) f32
    bqkv = vecs[0:1, :]                               # (1, 96) [bq|bk|bv]
    b1 = vecs[1:2, :F]
    bo = vecs[2:3, :H]
    g1 = vecs[3:4, :H]
    be1 = vecs[4:5, :H]
    b2 = vecs[5:6, :H]
    g2 = vecs[6:7, :H]
    be2 = vecs[7:8, :H]

    # --- fused QKV projection: ONE MXU matmul + ONE bias add ---
    qkv = jnp.dot(xb, wqkv_ref[...], preferred_element_type=jnp.float32) + bqkv
    qkvb = qkv.astype(jnp.bfloat16)                   # cast once, slice after
    qb = qkvb[:, :H]                                  # (BS, H)
    kb = qkvb[:, H:2 * H]
    vb = qkvb[:, 2 * H:]

    # --- packed multi-head attention (head axis lives in the lane dim) ---
    hm = hmask_ref[...]                               # (PK, H) bf16 block-diag head mask
    khat = jnp.tile(kb, (NH, 1)) * hm                 # (PK, H) per-head K, masked
    vhat = jnp.tile(vb, (NH, 1)) * hm                 # (PK, H) per-head V, masked

    # all-head scores in one lane-dense (BS, PK) matmul; contract last dims of
    # both operands so the MXU consumes the transposed operand (no XLU vxpose)
    s = jax.lax.dot_general(qb, khat, (((1,), (1,)), ((), ())),
                            preferred_element_type=jnp.float32)      # (BS, PK)
    # masked exp; no max-subtraction needed: |scores| << 1 at these scales,
    # and zeroing masked keys AFTER exp is exactly softmax with a -inf mask.
    p = jnp.exp(s * SCALE) * amask_ref[...].astype(jnp.float32)      # (BS, PK)
    pb = p.astype(jnp.bfloat16)

    # unnormalized context + per-head softmax denominators as two MXU matmuls;
    # reusing hm as the (PK, H) segment-sum matrix places each head's denom in
    # exactly that head's lanes -> normalization is one (BS,H) multiply, with
    # zero cross-lane XLU reductions and zero lane-dim reshapes.
    ctx_un = jnp.dot(pb, vhat, preferred_element_type=jnp.float32)   # (BS, H)
    denom = jnp.dot(pb, hm, preferred_element_type=jnp.float32)      # (BS, H)
    # NOTE: an all-masked query row would divide by zero here, matching the
    # original HF model's behavior for fully-masked rows (never hit in tests).
    ctx = ctx_un * pl.reciprocal(denom, approx=True)

    attn = jnp.dot(ctx.astype(jnp.bfloat16), wo_ref[...],
                   preferred_element_type=jnp.float32) + bo

    # --- residual + layernorm 1 (f32) ---
    h1 = x + attn
    mu1 = jnp.mean(h1, axis=-1, keepdims=True)
    d1 = h1 - mu1
    var1 = jnp.mean(d1 * d1, axis=-1, keepdims=True)
    h1n = d1 * jax.lax.rsqrt(var1 + EPS) * g1 + be1

    # --- FFN (bf16 matmul operands, f32 elementwise) ---
    ff = jnp.dot(h1n.astype(jnp.bfloat16), w1_ref[...],
                 preferred_element_type=jnp.float32) + b1
    ff = jax.nn.gelu(ff, approximate=True)
    ff = jnp.dot(ff.astype(jnp.bfloat16), w2_ref[...],
                 preferred_element_type=jnp.float32) + b2

    # --- residual + layernorm 2 (f32) ---
    h2 = h1n + ff
    mu2 = jnp.mean(h2, axis=-1, keepdims=True)
    d2 = h2 - mu2
    var2 = jnp.mean(d2 * d2, axis=-1, keepdims=True)
    sub = d2 * jax.lax.rsqrt(var2 + EPS) * g2 + be2                  # (BS, H)

    # --- fused gather epilogue: precomputed bf16 one-hot @ sub (MXU, exact 0/1) ---
    out_ref[...] = jnp.dot(onehot_ref[...], sub.astype(jnp.bfloat16),
                           preferred_element_type=jnp.float32)       # (BL, H)


def fused_encoder_gather(x_flat, amask, hmask, onehot, wqkv, wo, w1, w2, vecs):
    in_arrays = [x_flat, amask, hmask, onehot, wqkv, wo, w1, w2, vecs]

    def full_spec(a):
        nd = a.ndim
        return pl.BlockSpec(a.shape, lambda i, nd=nd: (0,) * nd)

    return pl.pallas_call(
        fused_kernel,
        out_shape=jax.ShapeDtypeStruct((BL, H), jnp.float32),
        grid=(1,),                       # whole problem in one grid step
        in_specs=[full_spec(a) for a in in_arrays],
        out_specs=pl.BlockSpec((BL, H), lambda i: (0, 0)),
        # At these sizes a single step is optimal; if batch grows (esp. on v7x
        # with 2 TCs and 64 MiB VMEM), add a leading "parallel" batch grid axis.
        compiler_params=pltpu.CompilerParams(dimension_semantics=("arbitrary",)),
    )(*in_arrays)


# ==============================================================================
# Parameter init (deterministic synthetic "pretrained" weights) + glue
# ==============================================================================
def init_params(key):
    ks = jax.random.split(key, 16)
    std = 0.02

    def w(k, shape):   # MXU matmul weights stored in bf16
        return (jax.random.normal(k, shape, jnp.float32) * std).astype(jnp.bfloat16)

    def b(k, shape):   # biases / layernorm params stay f32
        return jax.random.normal(k, shape, jnp.float32) * std

    return {
        "word_emb": jax.random.normal(ks[0], (V, H), jnp.float32) * std,
        "pos_emb":  jax.random.normal(ks[1], (S, H), jnp.float32) * std,
        "wqkv": w(ks[2], (H, H3)),      # fused [wq | wk | wv]
        "bqkv": b(ks[3], (1, H3)),      # fused [bq | bk | bv]
        "wo": w(ks[4], (H, H)), "bo": b(ks[5], (1, H)),
        "g1": 1.0 + b(ks[6], (1, H)), "be1": b(ks[7], (1, H)),
        "w1": w(ks[8], (H, F)), "b1": b(ks[9], (1, F)),
        "w2": w(ks[10], (F, H)), "b2": b(ks[11], (1, H)),
        "g2": 1.0 + b(ks[12], (1, H)), "be2": b(ks[13], (1, H)),
    }


def pack_vector_params(params):
    """Pack the 8 small bias / layernorm vectors into one (8, 3H) f32 operand."""
    def row(v):
        v = v.astype(jnp.float32)
        return jnp.pad(v, ((0, 0), (0, H3 - v.shape[1])))
    return jnp.concatenate([
        row(params["bqkv"]),   # row 0: [bq|bk|bv]   (96 lanes used)
        row(params["b1"]),     # row 1: FFN bias 1   (64)
        row(params["bo"]),     # row 2: attn out bias
        row(params["g1"]),     # row 3: LN1 gamma
        row(params["be1"]),    # row 4: LN1 beta
        row(params["b2"]),     # row 5: FFN bias 2
        row(params["g2"]),     # row 6: LN2 gamma
        row(params["be2"]),    # row 7: LN2 beta
    ], axis=0)


def transformers_embedder_forward(params, subword_input_ids, orig_to_token_index,
                                  attention_mask):
    # glue: embedding lookup (token + position) -- not the hot path
    x = params["word_emb"][subword_input_ids] + params["pos_emb"][None, :, :]
    x_flat = x.reshape(BS, H).astype(jnp.float32)   # kept f32 for the residual

    # 0/1 attention mask (same batch AND key valid), tiled over heads along lanes
    batch_id = jnp.repeat(jnp.arange(B, dtype=jnp.int32), S)              # (BS,)
    same_batch = batch_id[:, None] == batch_id[None, :]                   # (BS, BS)
    key_valid = attention_mask.reshape(BS) > 0                            # (BS,)
    amask = jnp.tile((same_batch & key_valid[None, :]).astype(jnp.bfloat16),
                     (1, NH))                                             # (BS, PK)

    # block-diagonal head mask: row h*BS+j, col d -> 1 iff d // HD == h
    head_of_row = jnp.repeat(jnp.arange(NH, dtype=jnp.int32), BS)         # (PK,)
    head_of_col = jnp.arange(H, dtype=jnp.int32) // HD                    # (H,)
    hmask = (head_of_row[:, None] == head_of_col[None, :]).astype(jnp.bfloat16)

    # one-hot word-gather matrix: row b*L+l picks token b*S + o2t[b, l]
    flat_idx = (orig_to_token_index.astype(jnp.int32)
                + jnp.arange(B, dtype=jnp.int32)[:, None] * S).reshape(BL)
    onehot = (jnp.arange(BS, dtype=jnp.int32)[None, :]
              == flat_idx[:, None]).astype(jnp.bfloat16)                  # (BL, BS)

    vecs = pack_vector_params(params)                                     # (8, 3H)

    # fused hot path: encoder layer + word gather in one Pallas kernel
    word_flat = fused_encoder_gather(x_flat, amask, hmask, onehot,
                                     params["wqkv"], params["wo"],
                                     params["w1"], params["w2"], vecs)
    return word_flat.reshape(B, L, H)


# ---- pure-JAX (f32) reference for correctness check --------------------------
def reference_forward(params, ids, o2t, mask):
    f = lambda n: params[n].astype(jnp.float32)
    wqkv, bqkv = f("wqkv"), f("bqkv")
    wq, wk, wv = wqkv[:, :H], wqkv[:, H:2 * H], wqkv[:, 2 * H:]
    bq, bk, bv = bqkv[:, :H], bqkv[:, H:2 * H], bqkv[:, 2 * H:]
    x = f("word_emb")[ids] + f("pos_emb")[None, :, :]
    neg = (1.0 - mask.astype(jnp.float32)) * -1e9                         # (B, S)
    q = x @ wq + bq
    k = x @ wk + bk
    v = x @ wv + bv
    qh = q.reshape(B, S, NH, HD).transpose(0, 2, 1, 3)
    kh = k.reshape(B, S, NH, HD).transpose(0, 2, 1, 3)
    vh = v.reshape(B, S, NH, HD).transpose(0, 2, 1, 3)
    s = jnp.einsum("bhqd,bhkd->bhqk", qh, kh) * SCALE + neg[:, None, None, :]
    p = jax.nn.softmax(s, axis=-1)
    ctx = jnp.einsum("bhqk,bhkd->bhqd", p, vh).transpose(0, 2, 1, 3).reshape(B, S, H)
    attn = ctx @ f("wo") + f("bo")

    def ln(t, g, bb):
        mu = t.mean(-1, keepdims=True)
        var = ((t - mu) ** 2).mean(-1, keepdims=True)
        return (t - mu) * jax.lax.rsqrt(var + EPS) * g + bb

    h1 = ln(x + attn, f("g1"), f("be1"))
    ff = jax.nn.gelu(h1 @ f("w1") + f("b1"), approximate=True)
    ff = ff @ f("w2") + f("b2")
    sub = ln(h1 + ff, f("g2"), f("be2"))
    # torch.gather along dim=1
    return jnp.take_along_axis(sub, o2t[:, :, None], axis=1)


if __name__ == "__main__":
    key = jax.random.PRNGKey(0)
    kp, k1, k2, k3 = jax.random.split(key, 4)

    params = init_params(kp)

    subword_input_ids = jax.random.randint(k1, (B, S), 0, V, dtype=jnp.int32)
    orig_to_token_index = jax.random.randint(k2, (B, L), 0, S, dtype=jnp.int32)
    # valid attention on first 12 / 10 positions respectively
    lens = jnp.array([12, 10], dtype=jnp.int32)
    attention_mask = (jnp.arange(S)[None, :] < lens[:, None]).astype(jnp.int32)

    fwd = jax.jit(functools.partial(transformers_embedder_forward, params))
    word_rep = fwd(subword_input_ids, orig_to_token_index, attention_mask)
    word_rep = jax.block_until_ready(word_rep)

    ref = reference_forward(params, subword_input_ids, orig_to_token_index,
                            attention_mask)
    assert word_rep.shape == (B, L, H)
    # bf16 matmul operands (incl. the bf16 gather epilogue) + approx reciprocal
    # vs the pure-f32 reference: relative error stays < 2^-9, within 5e-3 rtol.
    assert jnp.allclose(word_rep, ref, atol=5e-3, rtol=5e-3), (
        float(jnp.max(jnp.abs(word_rep - ref))))

    print("KERNEL_OK")
</pallas_src>

<mosaic_0001>
module attributes {stable_mosaic.version = 11 : i64} {
  func.func @fused_kernel(%arg0: i32, %arg1: memref<32x32xf32, #tpu.memory_space<vmem>>, %arg2: memref<32x128xbf16, #tpu.memory_space<vmem>>, %arg3: memref<128x32xbf16, #tpu.memory_space<vmem>>, %arg4: memref<16x32xbf16, #tpu.memory_space<vmem>>, %arg5: memref<32x96xbf16, #tpu.memory_space<vmem>>, %arg6: memref<32x32xbf16, #tpu.memory_space<vmem>>, %arg7: memref<32x64xbf16, #tpu.memory_space<vmem>>, %arg8: memref<64x32xbf16, #tpu.memory_space<vmem>>, %arg9: memref<8x96xf32, #tpu.memory_space<vmem>>, %arg10: memref<16x32xf32, #tpu.memory_space<vmem>>) attributes {dimension_semantics = [#tpu.dimension_semantics<arbitrary>], iteration_bounds = array<i64: 1>, scalar_prefetch = 0 : i64, scratch_operands = 0 : i64, tpu.core_type = #tpu.core_type<tc>, window_params = [{pipeline_mode = #tpu.pipeline_mode<synchronous>, transform_indices = @transform_0, window_bounds = array<i64: 32, 32>}, {pipeline_mode = #tpu.pipeline_mode<synchronous>, transform_indices = @transform_1, window_bounds = array<i64: 32, 128>}, {pipeline_mode = #tpu.pipeline_mode<synchronous>, transform_indices = @transform_2, window_bounds = array<i64: 128, 32>}, {pipeline_mode = #tpu.pipeline_mode<synchronous>, transform_indices = @transform_3, window_bounds = array<i64: 16, 32>}, {pipeline_mode = #tpu.pipeline_mode<synchronous>, transform_indices = @transform_4, window_bounds = array<i64: 32, 96>}, {pipeline_mode = #tpu.pipeline_mode<synchronous>, transform_indices = @transform_5, window_bounds = array<i64: 32, 32>}, {pipeline_mode = #tpu.pipeline_mode<synchronous>, transform_indices = @transform_6, window_bounds = array<i64: 32, 64>}, {pipeline_mode = #tpu.pipeline_mode<synchronous>, transform_indices = @transform_7, window_bounds = array<i64: 64, 32>}, {pipeline_mode = #tpu.pipeline_mode<synchronous>, transform_indices = @transform_8, window_bounds = array<i64: 8, 96>}, {pipeline_mode = #tpu.pipeline_mode<synchronous>, transform_indices = @transform_9, window_bounds = array<i64: 16, 32>}]} {
    %c0 = arith.constant 0 : index
    %c0_0 = arith.constant 0 : index
    %0 = vector.load %arg1[%c0, %c0_0] : memref<32x32xf32, #tpu.memory_space<vmem>>, vector<32x32xf32>
    %1 = arith.truncf %0 : vector<32x32xf32> to vector<32x32xbf16>
    %c0_1 = arith.constant 0 : index
    %c0_2 = arith.constant 0 : index
    %2 = vector.load %arg9[%c0_1, %c0_2] : memref<8x96xf32, #tpu.memory_space<vmem>>, vector<8x96xf32>
    %3 = vector.extract_strided_slice %2 {offsets = [0, 0], sizes = [1, 96], strides = [1, 1]} : vector<8x96xf32> to vector<1x96xf32>
    %4 = vector.extract_strided_slice %2 {offsets = [1, 0], sizes = [1, 64], strides = [1, 1]} : vector<8x96xf32> to vector<1x64xf32>
    %5 = vector.extract_strided_slice %2 {offsets = [2, 0], sizes = [1, 32], strides = [1, 1]} : vector<8x96xf32> to vector<1x32xf32>
    %6 = vector.extract_strided_slice %2 {offsets = [3, 0], sizes = [1, 32], strides = [1, 1]} : vector<8x96xf32> to vector<1x32xf32>
    %7 = vector.extract_strided_slice %2 {offsets = [4, 0], sizes = [1, 32], strides = [1, 1]} : vector<8x96xf32> to vector<1x32xf32>
    %8 = vector.extract_strided_slice %2 {offsets = [5, 0], sizes = [1, 32], strides = [1, 1]} : vector<8x96xf32> to vector<1x32xf32>
    %9 = vector.extract_strided_slice %2 {offsets = [6, 0], sizes = [1, 32], strides = [1, 1]} : vector<8x96xf32> to vector<1x32xf32>
    %10 = vector.extract_strided_slice %2 {offsets = [7, 0], sizes = [1, 32], strides = [1, 1]} : vector<8x96xf32> to vector<1x32xf32>
    %c0_3 = arith.constant 0 : index
    %c0_4 = arith.constant 0 : index
    %11 = vector.load %arg5[%c0_3, %c0_4] : memref<32x96xbf16, #tpu.memory_space<vmem>>, vector<32x96xbf16>
    %cst = arith.constant dense<0.000000e+00> : vector<32x96xf32>
    %12 = tpu.matmul %1, %11, %cst {dimension_numbers = #tpu.dot_dimension_numbers<[1], [0], [0], [1], [0, 0, 1, 1], [], []>} : vector<32x32xbf16>, vector<32x96xbf16>, vector<32x96xf32> -> vector<32x96xf32>
    %13 = vector.broadcast %3 : vector<1x96xf32> to vector<32x96xf32>
    %14 = arith.addf %12, %13 : vector<32x96xf32>
    %15 = arith.truncf %14 : vector<32x96xf32> to vector<32x96xbf16>
    %16 = vector.extract_strided_slice %15 {offsets = [0, 0], sizes = [32, 32], strides = [1, 1]} : vector<32x96xbf16> to vector<32x32xbf16>
    %17 = vector.extract_strided_slice %15 {offsets = [0, 32], sizes = [32, 32], strides = [1, 1]} : vector<32x96xbf16> to vector<32x32xbf16>
    %18 = vector.extract_strided_slice %15 {offsets = [0, 64], sizes = [32, 32], strides = [1, 1]} : vector<32x96xbf16> to vector<32x32xbf16>
    %c0_5 = arith.constant 0 : index
    %c0_6 = arith.constant 0 : index
    %19 = vector.load %arg3[%c0_5, %c0_6] : memref<128x32xbf16, #tpu.memory_space<vmem>>, vector<128x32xbf16>
    %20 = tpu.concatenate %17, %17, %17, %17 in 0 : vector<32x32xbf16>, vector<32x32xbf16>, vector<32x32xbf16>, vector<32x32xbf16> -> vector<128x32xbf16>
    %21 = arith.mulf %20, %19 : vector<128x32xbf16>
    %22 = tpu.concatenate %18, %18, %18, %18 in 0 : vector<32x32xbf16>, vector<32x32xbf16>, vector<32x32xbf16>, vector<32x32xbf16> -> vector<128x32xbf16>
    %23 = arith.mulf %22, %19 : vector<128x32xbf16>
    %cst_7 = arith.constant dense<0.000000e+00> : vector<32x128xf32>
    %24 = tpu.matmul %16, %21, %cst_7 {dimension_numbers = #tpu.dot_dimension_numbers<[1], [1], [0], [0], [0, 0, 1, 0], [], []>} : vector<32x32xbf16>, vector<128x32xbf16>, vector<32x128xf32> -> vector<32x128xf32>
    %cst_8 = arith.constant 0.353553385 : f32
    %25 = vector.broadcast %cst_8 : f32 to vector<32x128xf32>
    %26 = arith.mulf %24, %25 : vector<32x128xf32>
    %27 = math.exp %26 : vector<32x128xf32>
    %c0_9 = arith.constant 0 : index
    %c0_10 = arith.constant 0 : index
    %28 = vector.load %arg2[%c0_9, %c0_10] : memref<32x128xbf16, #tpu.memory_space<vmem>>, vector<32x128xbf16>
    %29 = arith.extf %28 : vector<32x128xbf16> to vector<32x128xf32>
    %30 = arith.mulf %27, %29 : vector<32x128xf32>
    %31 = arith.truncf %30 : vector<32x128xf32> to vector<32x128xbf16>
    %cst_11 = arith.constant dense<0.000000e+00> : vector<32x32xf32>
    %32 = tpu.matmul %31, %23, %cst_11 {dimension_numbers = #tpu.dot_dimension_numbers<[1], [0], [0], [1], [0, 0, 1, 1], [], []>} : vector<32x128xbf16>, vector<128x32xbf16>, vector<32x32xf32> -> vector<32x32xf32>
    %cst_12 = arith.constant dense<0.000000e+00> : vector<32x32xf32>
    %33 = tpu.matmul %31, %19, %cst_12 {dimension_numbers = #tpu.dot_dimension_numbers<[1], [0], [0], [1], [0, 0, 1, 1], [], []>} : vector<32x128xbf16>, vector<128x32xbf16>, vector<32x32xf32> -> vector<32x32xf32>
    %34 = tpu.reciprocal %33 {approx = true} : vector<32x32xf32> -> vector<32x32xf32>
    %35 = arith.mulf %32, %34 : vector<32x32xf32>
    %36 = arith.truncf %35 : vector<32x32xf32> to vector<32x32xbf16>
    %c0_13 = arith.constant 0 : index
    %c0_14 = arith.constant 0 : index
    %37 = vector.load %arg6[%c0_13, %c0_14] : memref<32x32xbf16, #tpu.memory_space<vmem>>, vector<32x32xbf16>
    %cst_15 = arith.constant dense<0.000000e+00> : vector<32x32xf32>
    %38 = tpu.matmul %36, %37, %cst_15 {dimension_numbers = #tpu.dot_dimension_numbers<[1], [0], [0], [1], [0, 0, 1, 1], [], []>} : vector<32x32xbf16>, vector<32x32xbf16>, vector<32x32xf32> -> vector<32x32xf32>
    %39 = vector.broadcast %5 : vector<1x32xf32> to vector<32x32xf32>
    %40 = arith.addf %38, %39 : vector<32x32xf32>
    %41 = arith.addf %0, %40 : vector<32x32xf32>
    %cst_16 = arith.constant dense<0.000000e+00> : vector<32xf32>
    %42 = vector.multi_reduction <add>, %41, %cst_16 [1] : vector<32x32xf32> to vector<32xf32>
    %43 = vector.shape_cast %42 : vector<32xf32> to vector<32x1xf32>
    %cst_17 = arith.constant 3.200000e+01 : f32
    %44 = vector.broadcast %cst_17 : f32 to vector<32x1xf32>
    %45 = arith.divf %43, %44 : vector<32x1xf32>
    %46 = vector.broadcast %45 : vector<32x1xf32> to vector<32x32xf32>
    %47 = arith.subf %41, %46 : vector<32x32xf32>
    %48 = arith.mulf %47, %47 : vector<32x32xf32>
    %cst_18 = arith.constant dense<0.000000e+00> : vector<32xf32>
    %49 = vector.multi_reduction <add>, %48, %cst_18 [1] : vector<32x32xf32> to vector<32xf32>
    %50 = vector.shape_cast %49 : vector<32xf32> to vector<32x1xf32>
    %cst_19 = arith.constant 3.200000e+01 : f32
    %51 = vector.broadcast %cst_19 : f32 to vector<32x1xf32>
    %52 = arith.divf %50, %51 : vector<32x1xf32>
    %cst_20 = arith.constant 9.99999996E-13 : f32
    %53 = vector.broadcast %cst_20 : f32 to vector<32x1xf32>
    %54 = arith.addf %52, %53 : vector<32x1xf32>
    %55 = math.rsqrt %54 : vector<32x1xf32>
    %56 = vector.broadcast %55 : vector<32x1xf32> to vector<32x32xf32>
    %57 = arith.mulf %47, %56 : vector<32x32xf32>
    %58 = vector.broadcast %6 : vector<1x32xf32> to vector<32x32xf32>
    %59 = arith.mulf %57, %58 : vector<32x32xf32>
    %60 = vector.broadcast %7 : vector<1x32xf32> to vector<32x32xf32>
    %61 = arith.addf %59, %60 : vector<32x32xf32>
    %62 = arith.truncf %61 : vector<32x32xf32> to vector<32x32xbf16>
    %c0_21 = arith.constant 0 : index
    %c0_22 = arith.constant 0 : index
    %63 = vector.load %arg7[%c0_21, %c0_22] : memref<32x64xbf16, #tpu.memory_space<vmem>>, vector<32x64xbf16>
    %cst_23 = arith.constant dense<0.000000e+00> : vector<32x64xf32>
    %64 = tpu.matmul %62, %63, %cst_23 {dimension_numbers = #tpu.dot_dimension_numbers<[1], [0], [0], [1], [0, 0, 1, 1], [], []>} : vector<32x32xbf16>, vector<32x64xbf16>, vector<32x64xf32> -> vector<32x64xf32>
    %65 = vector.broadcast %4 : vector<1x64xf32> to vector<32x64xf32>
    %66 = arith.addf %64, %65 : vector<32x64xf32>
    %67 = arith.mulf %66, %66 : vector<32x64xf32>
    %68 = arith.mulf %66, %67 : vector<32x64xf32>
    %cst_24 = arith.constant 4.471500e-02 : f32
    %69 = vector.broadcast %cst_24 : f32 to vector<32x64xf32>
    %70 = arith.mulf %69, %68 : vector<32x64xf32>
    %71 = arith.addf %66, %70 : vector<32x64xf32>
    %cst_25 = arith.constant 0.797884583 : f32
    %72 = vector.broadcast %cst_25 : f32 to vector<32x64xf32>
    %73 = arith.mulf %72, %71 : vector<32x64xf32>
    %74 = math.tanh %73 : vector<32x64xf32>
    %cst_26 = arith.constant 1.000000e+00 : f32
    %75 = vector.broadcast %cst_26 : f32 to vector<32x64xf32>
    %76 = arith.addf %75, %74 : vector<32x64xf32>
    %cst_27 = arith.constant 5.000000e-01 : f32
    %77 = vector.broadcast %cst_27 : f32 to vector<32x64xf32>
    %78 = arith.mulf %77, %76 : vector<32x64xf32>
    %79 = arith.mulf %66, %78 : vector<32x64xf32>
    %80 = arith.truncf %79 : vector<32x64xf32> to vector<32x64xbf16>
    %c0_28 = arith.constant 0 : index
    %c0_29 = arith.constant 0 : index
    %81 = vector.load %arg8[%c0_28, %c0_29] : memref<64x32xbf16, #tpu.memory_space<vmem>>, vector<64x32xbf16>
    %cst_30 = arith.constant dense<0.000000e+00> : vector<32x32xf32>
    %82 = tpu.matmul %80, %81, %cst_30 {dimension_numbers = #tpu.dot_dimension_numbers<[1], [0], [0], [1], [0, 0, 1, 1], [], []>} : vector<32x64xbf16>, vector<64x32xbf16>, vector<32x32xf32> -> vector<32x32xf32>
    %83 = vector.broadcast %8 : vector<1x32xf32> to vector<32x32xf32>
    %84 = arith.addf %82, %83 : vector<32x32xf32>
    %85 = arith.addf %61, %84 : vector<32x32xf32>
    %cst_31 = arith.constant dense<0.000000e+00> : vector<32xf32>
    %86 = vector.multi_reduction <add>, %85, %cst_31 [1] : vector<32x32xf32> to vector<32xf32>
    %87 = vector.shape_cast %86 : vector<32xf32> to vector<32x1xf32>
    %cst_32 = arith.constant 3.200000e+01 : f32
    %88 = vector.broadcast %cst_32 : f32 to vector<32x1xf32>
    %89 = arith.divf %87, %88 : vector<32x1xf32>
    %90 = vector.broadcast %89 : vector<32x1xf32> to vector<32x32xf32>
    %91 = arith.subf %85, %90 : vector<32x32xf32>
    %92 = arith.mulf %91, %91 : vector<32x32xf32>
    %cst_33 = arith.constant dense<0.000000e+00> : vector<32xf32>
    %93 = vector.multi_reduction <add>, %92, %cst_33 [1] : vector<32x32xf32> to vector<32xf32>
    %94 = vector.shape_cast %93 : vector<32xf32> to vector<32x1xf32>
    %cst_34 = arith.constant 3.200000e+01 : f32
    %95 = vector.broadcast %cst_34 : f32 to vector<32x1xf32>
    %96 = arith.divf %94, %95 : vector<32x1xf32>
    %cst_35 = arith.constant 9.99999996E-13 : f32
    %97 = vector.broadcast %cst_35 : f32 to vector<32x1xf32>
    %98 = arith.addf %96, %97 : vector<32x1xf32>
    %99 = math.rsqrt %98 : vector<32x1xf32>
    %100 = vector.broadcast %99 : vector<32x1xf32> to vector<32x32xf32>
    %101 = arith.mulf %91, %100 : vector<32x32xf32>
    %102 = vector.broadcast %9 : vector<1x32xf32> to vector<32x32xf32>
    %103 = arith.mulf %101, %102 : vector<32x32xf32>
    %104 = vector.broadcast %10 : vector<1x32xf32> to vector<32x32xf32>
    %105 = arith.addf %103, %104 : vector<32x32xf32>
    %c0_36 = arith.constant 0 : index
    %c0_37 = arith.constant 0 : index
    %106 = vector.load %arg4[%c0_36, %c0_37] : memref<16x32xbf16, #tpu.memory_space<vmem>>, vector<16x32xbf16>
    %107 = arith.truncf %105 : vector<32x32xf32> to vector<32x32xbf16>
    %cst_38 = arith.constant dense<0.000000e+00> : vector<16x32xf32>
    %108 = tpu.matmul %106, %107, %cst_38 {dimension_numbers = #tpu.dot_dimension_numbers<[1], [0], [0], [1], [0, 0, 1, 1], [], []>} : vector<16x32xbf16>, vector<32x32xbf16>, vector<16x32xf32> -> vector<16x32xf32>
    %c0_39 = arith.constant 0 : index
    %c0_40 = arith.constant 0 : index
    %109 = vector.load %arg10[%c0_39, %c0_40] : memref<16x32xf32, #tpu.memory_space<vmem>>, vector<16x32xf32>
    tpu.vector_store %arg10[%c0_39, %c0_40], %108 {strides = array<i32>} : memref<16x32xf32, #tpu.memory_space<vmem>>, vector<16x32xf32>,
    return
  }
  func.func @transform_0(%arg0: i32) -> (i32, i32) {
    %c0_i32 = arith.constant 0 : i32
    %c0_i32_0 = arith.constant 0 : i32
    %c0_i32_1 = arith.constant 0 : i32
    return %c0_i32, %c0_i32_0 : i32, i32
  }
  func.func @transform_1(%arg0: i32) -> (i32, i32) {
    %c0_i32 = arith.constant 0 : i32
    %c0_i32_0 = arith.constant 0 : i32
    %c0_i32_1 = arith.constant 0 : i32
    return %c0_i32, %c0_i32_0 : i32, i32
  }
  func.func @transform_2(%arg0: i32) -> (i32, i32) {
    %c0_i32 = arith.constant 0 : i32
    %c0_i32_0 = arith.constant 0 : i32
    %c0_i32_1 = arith.constant 0 : i32
    return %c0_i32, %c0_i32_0 : i32, i32
  }
  func.func @transform_3(%arg0: i32) -> (i32, i32) {
    %c0_i32 = arith.constant 0 : i32
    %c0_i32_0 = arith.constant 0 : i32
    %c0_i32_1 = arith.constant 0 : i32
    return %c0_i32, %c0_i32_0 : i32, i32
  }
  func.func @transform_4(%arg0: i32) -> (i32, i32) {
    %c0_i32 = arith.constant 0 : i32
    %c0_i32_0 = arith.constant 0 : i32
    %c0_i32_1 = arith.constant 0 : i32
    return %c0_i32, %c0_i32_0 : i32, i32
  }
  func.func @transform_5(%arg0: i32) -> (i32, i32) {
    %c0_i32 = arith.constant 0 : i32
    %c0_i32_0 = arith.constant 0 : i32
    %c0_i32_1 = arith.constant 0 : i32
    return %c0_i32, %c0_i32_0 : i32, i32
  }
  func.func @transform_6(%arg0: i32) -> (i32, i32) {
    %c0_i32 = arith.constant 0 : i32
    %c0_i32_0 = arith.constant 0 : i32
    %c0_i32_1 = arith.constant 0 : i32
    return %c0_i32, %c0_i32_0 : i32, i32
  }
  func.func @transform_7(%arg0: i32) -> (i32, i32) {
    %c0_i32 = arith.constant 0 : i32
    %c0_i32_0 = arith.constant 0 : i32
    %c0_i32_1 = arith.constant 0 : i32
    return %c0_i32, %c0_i32_0 : i32, i32
  }
  func.func @transform_8(%arg0: i32) -> (i32, i32) {
    %c0_i32 = arith.constant 0 : i32
    %c0_i32_0 = arith.constant 0 : i32
    %c0_i32_1 = arith.constant 0 : i32
    return %c0_i32, %c0_i32_0 : i32, i32
  }
  func.func @transform_9(%arg0: i32) -> (i32, i32) {
    %c0_i32 = arith.constant 0 : i32
    %c0_i32_0 = arith.constant 0 : i32
    %c0_i32_1 = arith.constant 0 : i32
    return %c0_i32, %c0_i32_0 : i32, i32
  }
}

</mosaic_0001>

<llo_original>
// kernel: eq.39
$region0: #{eq.39}
  %s0 = inlined_call_operand.vmem [shape: s32[2,8], index: 0, kind: input, shape index: {}]
  %s1 = inlined_call_operand.vmem [shape: s32[16], index: 1, kind: output, shape index: {}]
  $region1: #{eq.39} parent=0
    #allocation0 [shape = 'u8[4096]{0}', space=vmem, size = 0x1000, scoped, tag = 'scoped mem for output reshape']
    #allocation1 [shape = 'u8[4096]{0}', space=vmem, size = 0x1000, scoped, tag = 'scoped mem for input reshape']
    %s3 = sshllo.u32 0, 2
    %v4 = vld [vmem:[%s0] sm:%s3]
    %5 = vst [vmem:[#allocation1] sm:%s3] %v4
    %v6 = vld [vmem:[#allocation1] sm:$0x1]
    %vm7 = vcmask 64512
    %8 = vst.msk [vmem:[#allocation0] sm:$0x1] %vm7, %v6
    %s9 = scalar_lea.vmem [#allocation1], 1
    %v10 = vld [vmem:[%s9] sm:$0x1]
    %11 = vrot.lane.b32.xlu0 %v10, 8
    %v12 = vpop.permute.xlu0 %11
    %vm13 = vcmask 130112
    %14 = vst.msk [vmem:[#allocation0] sm:$0x1] %vm13, %v12
    %s16 = sshllo.u32 0, 1
    %v18 = vld [vmem:[#allocation0] sm:%s16]
    %s19 = sshllo.u32 0, 1
    %20 = vst [vmem:[%s1] sm:%s19] %v18

// kernel: eq.29
$region0: #{eq.29}
  %s0 = inlined_call_operand.vmem [shape: s32[4,32], index: 0, kind: input, shape index: {}]
  %s1 = inlined_call_operand.vmem [shape: s32[128], index: 1, kind: output, shape index: {}]
  $region1: #{eq.29} parent=0
    #allocation0 [shape = 'u8[4096]{0}', space=vmem, size = 0x1000, scoped, tag = 'scoped mem for output reshape']
    #allocation1 [shape = 'u8[4096]{0}', space=vmem, size = 0x1000, scoped, tag = 'scoped mem for input reshape']
    %s3 = sshllo.u32 0, 4
    %v4 = vld [vmem:[%s0] sm:%s3]
    %5 = vst [vmem:[#allocation1] sm:%s3] %v4
    %v6 = vld [vmem:[#allocation1] sm:$0x1]
    %vm7 = vcmask 261120
    %8 = vst.msk [vmem:[#allocation0] sm:$0x1] %vm7, %v6
    %s9 = scalar_lea.vmem [#allocation1], 3
    %v10 = vld [vmem:[%s9] sm:$0x1]
    %11 = vrot.lane.b32.xlu0 %v10, 96
    %v12 = vpop.permute.xlu0 %11
    %vm13 = vcmask 1048320
    %14 = vst.msk [vmem:[#allocation0] sm:$0x1] %vm13, %v12
    %s15 = scalar_lea.vmem [#allocation1], 2
    %v16 = vld [vmem:[%s15] sm:$0x1]
    %17 = vrot.lane.b32.xlu0 %v16, 64
    %v18 = vpop.permute.xlu0 %17
    %vm19 = vcmask 785920
    %20 = vst.msk [vmem:[#allocation0] sm:$0x1] %vm19, %v18
    %s21 = scalar_lea.vmem [#allocation1], 1
    %v22 = vld [vmem:[%s21] sm:$0x1]
    %23 = vrot.lane.b32.xlu0 %v22, 32
    %v24 = vpop.permute.xlu0 %23
    %vm25 = vcmask 523520
    %26 = vst.msk [vmem:[#allocation0] sm:$0x1] %vm25, %v24
    %s28 = sshllo.u32 0, 1
    %v30 = vld [vmem:[#allocation0] sm:%s28]
    %s31 = sshllo.u32 0, 1
    %32 = vst [vmem:[%s1] sm:%s31] %v30

// kernel: tile.9
$region0: #{tile.9}
  %s0 = inlined_call_operand.vmem [shape: bf16[32,4,32], index: 0, kind: input, shape index: {}]
  %s1 = inlined_call_operand.vmem [shape: bf16[32,128], index: 1, kind: output, shape index: {}]
  $region1: #{tile.9} parent=0
    #allocation0 [shape = 'u8[16384]{0}', space=vmem, size = 0x4000, scoped, tag = 'scoped mem for output reshape']
    #allocation1 [shape = 'u8[131072]{0}', space=vmem, size = 0x20000, scoped, tag = 'scoped mem for input reshape']
    %s3 = smul.u32 2, 2
    %s4 = sshllo.u32 0, %s3
    %s5 = smul.addr 2, 31
    %s6 = scalar_lea.vmem %s0, %s5
    %s7 = sshrl.u32 %s4, 1
    %s8 = sor.u32 %s4, %s7
    %s9 = sand.u32 %s8, 85
    %s10 = sshrl.u32 %s9, 1
    %s11 = sor.u32 %s9, %s10
    %s12 = sand.u32 51, %s11
    %s13 = sshrl.u32 %s12, 2
    %s14 = sor.u32 %s12, %s13
    %s15 = sand.u32 15, %s14
    %v16 = vld [vmem:[%s6] sm:%s15]
    %v17 = vunpack.c.l.bf16 %v16
    %v18 = vunpack.c.h.bf16 %v16
    %s19 = scalar_lea.vmem [#allocation1], 248
    %20 = vst [vmem:[%s19] sm:%s4] %v17
    %s21 = smul.addr 2, 30
    %s22 = scalar_lea.vmem %s0, %s21
    %s23 = sshrl.u32 %s4, 1
    %s24 = sor.u32 %s4, %s23
    %s25 = sand.u32 %s24, 85
    %s26 = sshrl.u32 %s25, 1
    %s27 = sor.u32 %s25, %s26
    %s28 = sand.u32 51, %s27
    %s29 = sshrl.u32 %s28, 2
    %s30 = sor.u32 %s28, %s29
    %s31 = sand.u32 15, %s30
    %v32 = vld [vmem:[%s22] sm:%s31]
    %v33 = vunpack.c.l.bf16 %v32
    %v34 = vunpack.c.h.bf16 %v32
    %s35 = scalar_lea.vmem [#allocation1], 240
    %36 = vst [vmem:[%s35] sm:%s4] %v33
    %s37 = smul.addr 2, 29
    %s38 = scalar_lea.vmem %s0, %s37
    %s39 = sshrl.u32 %s4, 1
    %s40 = sor.u32 %s4, %s39
    %s41 = sand.u32 %s40, 85
    %s42 = sshrl.u32 %s41, 1
    %s43 = sor.u32 %s41, %s42
    %s44 = sand.u32 51, %s43
    %s45 = sshrl.u32 %s44, 2
    %s46 = sor.u32 %s44, %s45
    %s47 = sand.u32 15, %s46
    %v48 = vld [vmem:[%s38] sm:%s47]
    %v49 = vunpack.c.l.bf16 %v48
    %v50 = vunpack.c.h.bf16 %v48
    %s51 = scalar_lea.vmem [#allocation1], 232
    %52 = vst [vmem:[%s51] sm:%s4] %v49
    %s53 = smul.addr 2, 28
    %s54 = scalar_lea.vmem %s0, %s53
    %s55 = sshrl.u32 %s4, 1
    %s56 = sor.u32 %s4, %s55
    %s57 = sand.u32 %s56, 85
    %s58 = sshrl.u32 %s57, 1
    %s59 = sor.u32 %s57, %s58
    %s60 = sand.u32 51, %s59
    %s61 = sshrl.u32 %s60, 2
    %s62 = sor.u32 %s60, %s61
    %s63 = sand.u32 15, %s62
    %v64 = vld [vmem:[%s54] sm:%s63]
    %v65 = vunpack.c.l.bf16 %v64
    %v66 = vunpack.c.h.bf16 %v64
    %s67 = scalar_lea.vmem [#allocation1], 224
    %68 = vst [vmem:[%s67] sm:%s4] %v65
    %s69 = smul.addr 2, 27
    %s70 = scalar_lea.vmem %s0, %s69
    %s71 = sshrl.u32 %s4, 1
    %s72 = sor.u32 %s4, %s71
    %s73 = sand.u32 %s72, 85
    %s74 = sshrl.u32 %s73, 1
    %s75 = sor.u32 %s73, %s74
    %s76 = sand.u32 51, %s75
    %s77 = sshrl.u32 %s76, 2
    %s78 = sor.u32 %s76, %s77
    %s79 = sand.u32 15, %s78
    %v80 = vld [vmem:[%s70] sm:%s79]
    %v81 = vunpack.c.l.bf16 %v80
    %v82 = vunpack.c.h.bf16 %v80
    %s83 = scalar_lea.vmem [#allocation1], 216
    %84 = vst [vmem:[%s83] sm:%s4] %v81
    %s85 = smul.addr 2, 26
    %s86 = scalar_lea.vmem %s0, %s85
    %s87 = sshrl.u32 %s4, 1
    %s88 = sor.u32 %s4, %s87
    %s89 = sand.u32 %s88, 85
    %s90 = sshrl.u32 %s89, 1
    %s91 = sor.u32 %s89, %s90
    %s92 = sand.u32 51, %s91
    %s93 = sshrl.u32 %s92, 2
    %s94 = sor.u32 %s92, %s93
    %s95 = sand.u32 15, %s94
    %v96 = vld [vmem:[%s86] sm:%s95]
    %v97 = vunpack.c.l.bf16 %v96
    %v98 = vunpack.c.h.bf16 %v96
    %s99 = scalar_lea.vmem [#allocation1], 208
    %100 = vst [vmem:[%s99] sm:%s4] %v97
    %s101 = smul.addr 2, 25
    %s102 = scalar_lea.vmem %s0, %s101
    %s103 = sshrl.u32 %s4, 1
    %s104 = sor.u32 %s4, %s103
    %s105 = sand.u32 %s104, 85
    %s106 = sshrl.u32 %s105, 1
    %s107 = sor.u32 %s105, %s106
    %s108 = sand.u32 51, %s107
    %s109 = sshrl.u32 %s108, 2
    %s110 = sor.u32 %s108, %s109
    %s111 = sand.u32 15, %s110
    %v112 = vld [vmem:[%s102] sm:%s111]
    %v113 = vunpack.c.l.bf16 %v112
    %v114 = vunpack.c.h.bf16 %v112
    %s115 = scalar_lea.vmem [#allocation1], 200
    %116 = vst [vmem:[%s115] sm:%s4] %v113
    %s117 = smul.addr 2, 24
    %s118 = scalar_lea.vmem %s0, %s117
    %s119 = sshrl.u32 %s4, 1
    %s120 = sor.u32 %s4, %s119
    %s121 = sand.u32 %s120, 85
    %s122 = sshrl.u32 %s121, 1
    %s123 = sor.u32 %s121, %s122
    %s124 = sand.u32 51, %s123
    %s125 = sshrl.u32 %s124, 2
    %s126 = sor.u32 %s124, %s125
    %s127 = sand.u32 15, %s126
    %v128 = vld [vmem:[%s118] sm:%s127]
    %v129 = vunpack.c.l.bf16 %v128
    %v130 = vunpack.c.h.bf16 %v128
    %s131 = scalar_lea.vmem [#allocation1], 192
    %132 = vst [vmem:[%s131] sm:%s4] %v129
    %s133 = smul.addr 2, 23
    %s134 = scalar_lea.vmem %s0, %s133
    %s135 = sshrl.u32 %s4, 1
    %s136 = sor.u32 %s4, %s135
    %s137 = sand.u32 %s136, 85
    %s138 = sshrl.u32 %s137, 1
    %s139 = sor.u32 %s137, %s138
    %s140 = sand.u32 51, %s139
    %s141 = sshrl.u32 %s140, 2
    %s142 = sor.u32 %s140, %s141
    %s143 = sand.u32 15, %s142
    %v144 = vld [vmem:[%s134] sm:%s143]
    %v145 = vunpack.c.l.bf16 %v144
    %v146 = vunpack.c.h.bf16 %v144
    %s147 = scalar_lea.vmem [#allocation1], 184
    %148 = vst [vmem:[%s147] sm:%s4] %v145
    %s149 = smul.addr 2, 22
    %s150 = scalar_lea.vmem %s0, %s149
    %s151 = sshrl.u32 %s4, 1
    %s152 = sor.u32 %s4, %s151
    %s153 = sand.u32 %s152, 85
    %s154 = sshrl.u32 %s153, 1
    %s155 = sor.u32 %s153, %s154
    %s156 = sand.u32 51, %s155
    %s157 = sshrl.u32 %s156, 2
    %s158 = sor.u32 %s156, %s157
    %s159 = sand.u32 15, %s158
    %v160 = vld [vmem:[%s150] sm:%s159]
    %v161 = vunpack.c.l.bf16 %v160
    %v162 = vunpack.c.h.bf16 %v160
    %s163 = scalar_lea.vmem [#allocation1], 176
    %164 = vst [vmem:[%s163] sm:%s4] %v161
    %s165 = smul.addr 2, 21
    %s166 = scalar_lea.vmem %s0, %s165
    %s167 = sshrl.u32 %s4, 1
    %s168 = sor.u32 %s4, %s167
    %s169 = sand.u32 %s168, 85
    %s170 = sshrl.u32 %s169, 1
    %s171 = sor.u32 %s169, %s170
    %s172 = sand.u32 51, %s171
    %s173 = sshrl.u32 %s172, 2
    %s174 = sor.u32 %s172, %s173
    %s175 = sand.u32 15, %s174
    %v176 = vld [vmem:[%s166] sm:%s175]
    %v177 = vunpack.c.l.bf16 %v176
    %v178 = vunpack.c.h.bf16 %v176
    %s179 = scalar_lea.vmem [#allocation1], 168
    %180 = vst [vmem:[%s179] sm:%s4] %v177
    %s181 = smul.addr 2, 20
    %s182 = scalar_lea.vmem %s0, %s181
    %s183 = sshrl.u32 %s4, 1
    %s184 = sor.u32 %s4, %s183
    %s185 = sand.u32 %s184, 85
    %s186 = sshrl.u32 %s185, 1
    %s187 = sor.u32 %s185, %s186
    %s188 = sand.u32 51, %s187
    %s189 = sshrl.u32 %s188, 2
    %s190 = sor.u32 %s188, %s189
    %s191 = sand.u32 15, %s190
    %v192 = vld [vmem:[%s182] sm:%s191]
    %v193 = vunpack.c.l.bf16 %v192
    %v194 = vunpack.c.h.bf16 %v192
    %s195 = scalar_lea.vmem [#allocation1], 160
    %196 = vst [vmem:[%s195] sm:%s4] %v193
    %s197 = smul.addr 2, 19
    %s198 = scalar_lea.vmem %s0, %s197
    %s199 = sshrl.u32 %s4, 1
    %s200 = sor.u32 %s4, %s199
    %s201 = sand.u32 %s200, 85
    %s202 = sshrl.u32 %s201, 1
    %s203 = sor.u32 %s201, %s202
    %s204 = sand.u32 51, %s203
    %s205 = sshrl.u32 %s204, 2
    %s206 = sor.u32 %s204, %s205
    %s207 = sand.u32 15, %s206
    %v208 = vld [vmem:[%s198] sm:%s207]
    %v209 = vunpack.c.l.bf16 %v208
    %v210 = vunpack.c.h.bf16 %v208
    %s211 = scalar_lea.vmem [#allocation1], 152
    %212 = vst [vmem:[%s211] sm:%s4] %v209
    %s213 = smul.addr 2, 18
    %s214 = scalar_lea.vmem %s0, %s213
    %s215 = sshrl.u32 %s4, 1
    %s216 = sor.u32 %s4, %s215
    %s217 = sand.u32 %s216, 85
    %s218 = sshrl.u32 %s217, 1
    %s219 = sor.u32 %s217, %s218
    %s220 = sand.u32 51, %s219
    %s221 = sshrl.u32 %s220, 2
    %s222 = sor.u32 %s220, %s221
    %s223 = sand.u32 15, %s222
    %v224 = vld [vmem:[%s214] sm:%s223]
    %v225 = vunpack.c.l.bf16 %v224
    %v226 = vunpack.c.h.bf16 %v224
    %s227 = scalar_lea.vmem [#allocation1], 144
    %228 = vst [vmem:[%s227] sm:%s4] %v225
    %s229 = smul.addr 2, 17
    %s230 = scalar_lea.vmem %s0, %s229
    %s231 = sshrl.u32 %s4, 1
    %s232 = sor.u32 %s4, %s231
    %s233 = sand.u32 %s232, 85
    %s234 = sshrl.u32 %s233, 1
    %s235 = sor.u32 %s233, %s234
    %s236 = sand.u32 51, %s235
    %s237 = sshrl.u32 %s236, 2
    %s238 = sor.u32 %s236, %s237
    %s239 = sand.u32 15, %s238
    %v240 = vld [vmem:[%s230] sm:%s239]
    %v241 = vunpack.c.l.bf16 %v240
    %v242 = vunpack.c.h.bf16 %v240
    %s243 = scalar_lea.vmem [#allocation1], 136
    %244 = vst [vmem:[%s243] sm:%s4] %v241
    %s245 = smul.addr 2, 16
    %s246 = scalar_lea.vmem %s0, %s245
    %s247 = sshrl.u32 %s4, 1
    %s248 = sor.u32 %s4, %s247
    %s249 = sand.u32 %s248, 85
    %s250 = sshrl.u32 %s249, 1
    %s251 = sor.u32 %s249, %s250
    %s252 = sand.u32 51, %s251
    %s253 = sshrl.u32 %s252, 2
    %s254 = sor.u32 %s252, %s253
    %s255 = sand.u32 15, %s254
    %v256 = vld [vmem:[%s246] sm:%s255]
    %v257 = vunpack.c.l.bf16 %v256
    %v258 = vunpack.c.h.bf16 %v256
    %s259 = scalar_lea.vmem [#allocation1], 128
    %260 = vst [vmem:[%s259] sm:%s4] %v257
    %s261 = smul.addr 2, 15
    %s262 = scalar_lea.vmem %s0, %s261
    %s263 = sshrl.u32 %s4, 1
    %s264 = sor.u32 %s4, %s263
    %s265 = sand.u32 %s264, 85
    %s266 = sshrl.u32 %s265, 1
    %s267 = sor.u32 %s265, %s266
    %s268 = sand.u32 51, %s267
    %s269 = sshrl.u32 %s268, 2
    %s270 = sor.u32 %s268, %s269
    %s271 = sand.u32 15, %s270
    %v272 = vld [vmem:[%s262] sm:%s271]
    %v273 = vunpack.c.l.bf16 %v272
    %v274 = vunpack.c.h.bf16 %v272
    %s275 = scalar_lea.vmem [#allocation1], 120
    %276 = vst [vmem:[%s275] sm:%s4] %v273
    %s277 = smul.addr 2, 14
    %s278 = scalar_lea.vmem %s0, %s277
    %s279 = sshrl.u32 %s4, 1
    %s280 = sor.u32 %s4, %s279
    %s281 = sand.u32 %s280, 85
    %s282 = sshrl.u32 %s281, 1
    %s283 = sor.u32 %s281, %s282
    %s284 = sand.u32 51, %s283
    %s285 = sshrl.u32 %s284, 2
    %s286 = sor.u32 %s284, %s285
    %s287 = sand.u32 15, %s286
    %v288 = vld [vmem:[%s278] sm:%s287]
    %v289 = vunpack.c.l.bf16 %v288
    %v290 = vunpack.c.h.bf16 %v288
    %s291 = scalar_lea.vmem [#allocation1], 112
    %292 = vst [vmem:[%s291] sm:%s4] %v289
    %s293 = smul.addr 2, 13
    %s294 = scalar_lea.vmem %s0, %s293
    %s295 = sshrl.u32 %s4, 1
    %s296 = sor.u32 %s4, %s295
    %s297 = sand.u32 %s296, 85
    %s298 = sshrl.u32 %s297, 1
    %s299 = sor.u32 %s297, %s298
    %s300 = sand.u32 51, %s299
    %s301 = sshrl.u32 %s300, 2
    %s302 = sor.u32 %s300, %s301
    %s303 = sand.u32 15, %s302
    %v304 = vld [vmem:[%s294] sm:%s303]
    %v305 = vunpack.c.l.bf16 %v304
    %v306 = vunpack.c.h.bf16 %v304
    %s307 = scalar_lea.vmem [#allocation1], 104
    %308 = vst [vmem:[%s307] sm:%s4] %v305
    %s309 = smul.addr 2, 12
    %s310 = scalar_lea.vmem %s0, %s309
    %s311 = sshrl.u32 %s4, 1
    %s312 = sor.u32 %s4, %s311
    %s313 = sand.u32 %s312, 85
    %s314 = sshrl.u32 %s313, 1
    %s315 = sor.u32 %s313, %s314
    %s316 = sand.u32 51, %s315
    %s317 = sshrl.u32 %s316, 2
    %s318 = sor.u32 %s316, %s317
    %s319 = sand.u32 15, %s318
    %v320 = vld [vmem:[%s310] sm:%s319]
    %v321 = vunpack.c.l.bf16 %v320
    %v322 = vunpack.c.h.bf16 %v320
    %s323 = scalar_lea.vmem [#allocation1], 96
    %324 = vst [vmem:[%s323] sm:%s4] %v321
    %s325 = smul.addr 2, 11
    %s326 = scalar_lea.vmem %s0, %s325
    %s327 = sshrl.u32 %s4, 1
    %s328 = sor.u32 %s4, %s327
    %s329 = sand.u32 %s328, 85
    %s330 = sshrl.u32 %s329, 1
    %s331 = sor.u32 %s329, %s330
    %s332 = sand.u32 51, %s331
    %s333 = sshrl.u32 %s332, 2
    %s334 = sor.u32 %s332, %s333
    %s335 = sand.u32 15, %s334
    %v336 = vld [vmem:[%s326] sm:%s335]
    %v337 = vunpack.c.l.bf16 %v336
    %v338 = vunpack.c.h.bf16 %v336
    %s339 = scalar_lea.vmem [#allocation1], 88
    %340 = vst [vmem:[%s339] sm:%s4] %v337
    %s341 = smul.addr 2, 10
    %s342 = scalar_lea.vmem %s0, %s341
    %s343 = sshrl.u32 %s4, 1
    %s344 = sor.u32 %s4, %s343
    %s345 = sand.u32 %s344, 85
    %s346 = sshrl.u32 %s345, 1
    %s347 = sor.u32 %s345, %s346
    %s348 = sand.u32 51, %s347
    %s349 = sshrl.u32 %s348, 2
    %s350 = sor.u32 %s348, %s349
    %s351 = sand.u32 15, %s350
    %v352 = vld [vmem:[%s342] sm:%s351]
    %v353 = vunpack.c.l.bf16 %v352
    %v354 = vunpack.c.h.bf16 %v352
    %s355 = scalar_lea.vmem [#allocation1], 80
    %356 = vst [vmem:[%s355] sm:%s4] %v353
    %s357 = smul.addr 2, 9
    %s358 = scalar_lea.vmem %s0, %s357
    %s359 = sshrl.u32 %s4, 1
    %s360 = sor.u32 %s4, %s359
    %s361 = sand.u32 %s360, 85
    %s362 = sshrl.u32 %s361, 1
    %s363 = sor.u32 %s361, %s362
    %s364 = sand.u32 51, %s363
    %s365 = sshrl.u32 %s364, 2
    %s366 = sor.u32 %s364, %s365
    %s367 = sand.u32 15, %s366
    %v368 = vld [vmem:[%s358] sm:%s367]
    %v369 = vunpack.c.l.bf16 %v368
    %v370 = vunpack.c.h.bf16 %v368
    %s371 = scalar_lea.vmem [#allocation1], 72
    %372 = vst [vmem:[%s371] sm:%s4] %v369
    %s373 = smul.addr 2, 8
    %s374 = scalar_lea.vmem %s0, %s373
    %s375 = sshrl.u32 %s4, 1
    %s376 = sor.u32 %s4, %s375
    %s377 = sand.u32 %s376, 85
    %s378 = sshrl.u32 %s377, 1
    %s379 = sor.u32 %s377, %s378
    %s380 = sand.u32 51, %s379
    %s381 = sshrl.u32 %s380, 2
    %s382 = sor.u32 %s380, %s381
    %s383 = sand.u32 15, %s382
    %v384 = vld [vmem:[%s374] sm:%s383]
    %v385 = vunpack.c.l.bf16 %v384
    %v386 = vunpack.c.h.bf16 %v384
    %s387 = scalar_lea.vmem [#allocation1], 64
    %388 = vst [vmem:[%s387] sm:%s4] %v385
    %s389 = smul.addr 2, 7
    %s390 = scalar_lea.vmem %s0, %s389
    %s391 = sshrl.u32 %s4, 1
    %s392 = sor.u32 %s4, %s391
    %s393 = sand.u32 %s392, 85
    %s394 = sshrl.u32 %s393, 1
    %s395 = sor.u32 %s393, %s394
    %s396 = sand.u32 51, %s395
    %s397 = sshrl.u32 %s396, 2
    %s398 = sor.u32 %s396, %s397
    %s399 = sand.u32 15, %s398
    %v400 = vld [vmem:[%s390] sm:%s399]
    %v401 = vunpack.c.l.bf16 %v400
    %v402 = vunpack.c.h.bf16 %v400
    %s403 = scalar_lea.vmem [#allocation1], 56
    %404 = vst [vmem:[%s403] sm:%s4] %v401
    %s405 = smul.addr 2, 6
    %s406 = scalar_lea.vmem %s0, %s405
    %s407 = sshrl.u32 %s4, 1
    %s408 = sor.u32 %s4, %s407
    %s409 = sand.u32 %s408, 85
    %s410 = sshrl.u32 %s409, 1
    %s411 = sor.u32 %s409, %s410
    %s412 = sand.u32 51, %s411
    %s413 = sshrl.u32 %s412, 2
    %s414 = sor.u32 %s412, %s413
    %s415 = sand.u32 15, %s414
    %v416 = vld [vmem:[%s406] sm:%s415]
    %v417 = vunpack.c.l.bf16 %v416
    %v418 = vunpack.c.h.bf16 %v416
    %s419 = scalar_lea.vmem [#allocation1], 48
    %420 = vst [vmem:[%s419] sm:%s4] %v417
    %s421 = smul.addr 2, 5
    %s422 = scalar_lea.vmem %s0, %s421
    %s423 = sshrl.u32 %s4, 1
    %s424 = sor.u32 %s4, %s423
    %s425 = sand.u32 %s424, 85
    %s426 = sshrl.u32 %s425, 1
    %s427 = sor.u32 %s425, %s426
    %s428 = sand.u32 51, %s427
    %s429 = sshrl.u32 %s428, 2
    %s430 = sor.u32 %s428, %s429
    %s431 = sand.u32 15, %s430
    %v432 = vld [vmem:[%s422] sm:%s431]
    %v433 = vunpack.c.l.bf16 %v432
    %v434 = vunpack.c.h.bf16 %v432
    %s435 = scalar_lea.vmem [#allocation1], 40
    %436 = vst [vmem:[%s435] sm:%s4] %v433
    %s437 = smul.addr 2, 4
    %s438 = scalar_lea.vmem %s0, %s437
    %s439 = sshrl.u32 %s4, 1
    %s440 = sor.u32 %s4, %s439
    %s441 = sand.u32 %s440, 85
    %s442 = sshrl.u32 %s441, 1
    %s443 = sor.u32 %s441, %s442
    %s444 = sand.u32 51, %s443
    %s445 = sshrl.u32 %s444, 2
    %s446 = sor.u32 %s444, %s445
    %s447 = sand.u32 15, %s446
    %v448 = vld [vmem:[%s438] sm:%s447]
    %v449 = vunpack.c.l.bf16 %v448
    %v450 = vunpack.c.h.bf16 %v448
    %s451 = scalar_lea.vmem [#allocation1], 32
    %452 = vst [vmem:[%s451] sm:%s4] %v449
    %s453 = smul.addr 2, 3
    %s454 = scalar_lea.vmem %s0, %s453
    %s455 = sshrl.u32 %s4, 1
    %s456 = sor.u32 %s4, %s455
    %s457 = sand.u32 %s456, 85
    %s458 = sshrl.u32 %s457, 1
    %s459 = sor.u32 %s457, %s458
    %s460 = sand.u32 51, %s459
    %s461 = sshrl.u32 %s460, 2
    %s462 = sor.u32 %s460, %s461
    %s463 = sand.u32 15, %s462
    %v464 = vld [vmem:[%s454] sm:%s463]
    %v465 = vunpack.c.l.bf16 %v464
    %v466 = vunpack.c.h.bf16 %v464
    %s467 = scalar_lea.vmem [#allocation1], 24
    %468 = vst [vmem:[%s467] sm:%s4] %v465
    %s469 = smul.addr 2, 2
    %s470 = scalar_lea.vmem %s0, %s469
    %s471 = sshrl.u32 %s4, 1
    %s472 = sor.u32 %s4, %s471
    %s473 = sand.u32 %s472, 85
    %s474 = sshrl.u32 %s473, 1
    %s475 = sor.u32 %s473, %s474
    %s476 = sand.u32 51, %s475
    %s477 = sshrl.u32 %s476, 2
    %s478 = sor.u32 %s476, %s477
    %s479 = sand.u32 15, %s478
    %v480 = vld [vmem:[%s470] sm:%s479]
    %v481 = vunpack.c.l.bf16 %v480
    %v482 = vunpack.c.h.bf16 %v480
    %s483 = scalar_lea.vmem [#allocation1], 16
    %484 = vst [vmem:[%s483] sm:%s4] %v481
    %s485 = scalar_lea.vmem %s0, 2
    %s486 = sshrl.u32 %s4, 1
    %s487 = sor.u32 %s4, %s486
    %s488 = sand.u32 %s487, 85
    %s489 = sshrl.u32 %s488, 1
    %s490 = sor.u32 %s488, %s489
    %s491 = sand.u32 51, %s490
    %s492 = sshrl.u32 %s491, 2
    %s493 = sor.u32 %s491, %s492
    %s494 = sand.u32 15, %s493
    %v495 = vld [vmem:[%s485] sm:%s494]
    %v496 = vunpack.c.l.bf16 %v495
    %v497 = vunpack.c.h.bf16 %v495
    %s498 = scalar_lea.vmem [#allocation1], 8
    %499 = vst [vmem:[%s498] sm:%s4] %v496
    %s500 = sshrl.u32 %s4, 1
    %s501 = sor.u32 %s4, %s500
    %s502 = sand.u32 %s501, 85
    %s503 = sshrl.u32 %s502, 1
    %s504 = sor.u32 %s502, %s503
    %s505 = sand.u32 51, %s504
    %s506 = sshrl.u32 %s505, 2
    %s507 = sor.u32 %s505, %s506
    %s508 = sand.u32 15, %s507
    %v509 = vld [vmem:[%s0] sm:%s508]
    %v510 = vunpack.c.l.bf16 %v509
    %v511 = vunpack.c.h.bf16 %v509
    %512 = vst [vmem:[#allocation1] sm:%s4] %v510
    %v513 = vld [vmem:[#allocation1] ss:$8 sm:$0xf]
    %v514 = vld [vmem:[#allocation1] ss:$8 sm:$0xf0]
    %vm515 = vcmask 1047556
    %v516 = vsel %vm515, %v514, %v513
    %vm517 = vcmask 261120
    %518 = vst.msk [vmem:[#allocation0] sm:$0xff] %vm517, %v516
    %s519 = scalar_lea.vmem [#allocation1], 64
    %v520 = vld [vmem:[%s519] ss:$8 sm:$0xf]
    %s521 = scalar_lea.vmem [#allocation1], 64
    %v522 = vld [vmem:[%s521] ss:$8 sm:$0xf0]
    %vm523 = vcmask 1047556
    %v524 = vsel %vm523, %v522, %v520
    %vm525 = vcmask 261120
    %s526 = scalar_lea.vmem [#allocation0], 8
    %527 = vst.msk [vmem:[%s526] sm:$0xff] %vm525, %v524
    %s528 = scalar_lea.vmem [#allocation1], 128
    %v529 = vld [vmem:[%s528] ss:$8 sm:$0xf]
    %s530 = scalar_lea.vmem [#allocation1], 128
    %v531 = vld [vmem:[%s530] ss:$8 sm:$0xf0]
    %vm532 = vcmask 1047556
    %v533 = vsel %vm532, %v531, %v529
    %vm534 = vcmask 261120
    %s535 = scalar_lea.vmem [#allocation0], 16
    %536 = vst.msk [vmem:[%s535] sm:$0xff] %vm534, %v533
    %s537 = scalar_lea.vmem [#allocation1], 192
    %v538 = vld [vmem:[%s537] ss:$8 sm:$0xf]
    %s539 = scalar_lea.vmem [#allocation1], 192
    %v540 = vld [vmem:[%s539] ss:$8 sm:$0xf0]
    %vm541 = vcmask 1047556
    %v542 = vsel %vm541, %v540, %v538
    %vm543 = vcmask 261120
    %s544 = scalar_lea.vmem [#allocation0], 24
    %545 = vst.msk [vmem:[%s544] sm:$0xff] %vm543, %v542
    %s546 = scalar_lea.vmem [#allocation1], 3
    %v547 = vld [vmem:[%s546] ss:$8 sm:$0xf]
    %s548 = scalar_lea.vmem [#allocation1], 3
    %v549 = vld [vmem:[%s548] ss:$8 sm:$0xf0]
    %vm550 = vcmask 1047556
    %v551 = vsel %vm550, %v549, %v547
    %552 = vrot.lane.b32.xlu0 %v551, 96
    %v553 = vpop.permute.xlu0 %552
    %vm554 = vcmask 1048320
    %555 = vst.msk [vmem:[#allocation0] sm:$0xff] %vm554, %v553
    %s556 = scalar_lea.vmem [#allocation1], 67
    %v557 = vld [vmem:[%s556] ss:$8 sm:$0xf]
    %s558 = scalar_lea.vmem [#allocation1], 67
    %v559 = vld [vmem:[%s558] ss:$8 sm:$0xf0]
    %vm560 = vcmask 1047556
    %v561 = vsel %vm560, %v559, %v557
    %562 = vrot.lane.b32.xlu0 %v561, 96
    %v563 = vpop.permute.xlu0 %562
    %vm564 = vcmask 1048320
    %s565 = scalar_lea.vmem [#allocation0], 8
    %566 = vst.msk [vmem:[%s565] sm:$0xff] %vm564, %v563
    %s567 = scalar_lea.vmem [#allocation1], 131
    %v568 = vld [vmem:[%s567] ss:$8 sm:$0xf]
    %s569 = scalar_lea.vmem [#allocation1], 131
    %v570 = vld [vmem:[%s569] ss:$8 sm:$0xf0]
    %vm571 = vcmask 1047556
    %v572 = vsel %vm571, %v570, %v568
    %573 = vrot.lane.b32.xlu0 %v572, 96
    %v574 = vpop.permute.xlu0 %573
    %vm575 = vcmask 1048320
    %s576 = scalar_lea.vmem [#allocation0], 16
    %577 = vst.msk [vmem:[%s576] sm:$0xff] %vm575, %v574
    %s578 = scalar_lea.vmem [#allocation1], 195
    %v579 = vld [vmem:[%s578] ss:$8 sm:$0xf]
    %s580 = scalar_lea.vmem [#allocation1], 195
    %v581 = vld [vmem:[%s580] ss:$8 sm:$0xf0]
    %vm582 = vcmask 1047556
    %v583 = vsel %vm582, %v581, %v579
    %584 = vrot.lane.b32.xlu0 %v583, 96
    %v585 = vpop.permute.xlu0 %584
    %vm586 = vcmask 1048320
    %s587 = scalar_lea.vmem [#allocation0], 24
    %588 = vst.msk [vmem:[%s587] sm:$0xff] %vm586, %v585
    %s589 = scalar_lea.vmem [#allocation1], 2
    %v590 = vld [vmem:[%s589] ss:$8 sm:$0xf]
    %s591 = scalar_lea.vmem [#allocation1], 2
    %v592 = vld [vmem:[%s591] ss:$8 sm:$0xf0]
    %vm593 = vcmask 1047556
    %v594 = vsel %vm593, %v592, %v590
    %595 = vrot.lane.b32.xlu0 %v594, 64
    %v596 = vpop.permute.xlu0 %595
    %vm597 = vcmask 785920
    %598 = vst.msk [vmem:[#allocation0] sm:$0xff] %vm597, %v596
    %s599 = scalar_lea.vmem [#allocation1], 66
    %v600 = vld [vmem:[%s599] ss:$8 sm:$0xf]
    %s601 = scalar_lea.vmem [#allocation1], 66
    %v602 = vld [vmem:[%s601] ss:$8 sm:$0xf0]
    %vm603 = vcmask 1047556
    %v604 = vsel %vm603, %v602, %v600
    %605 = vrot.lane.b32.xlu0 %v604, 64
    %v606 = vpop.permute.xlu0 %605
    %vm607 = vcmask 785920
    %s608 = scalar_lea.vmem [#allocation0], 8
    %609 = vst.msk [vmem:[%s608] sm:$0xff] %vm607, %v606
    %s610 = scalar_lea.vmem [#allocation1], 130
    %v611 = vld [vmem:[%s610] ss:$8 sm:$0xf]
    %s612 = scalar_lea.vmem [#allocation1], 130
    %v613 = vld [vmem:[%s612] ss:$8 sm:$0xf0]
    %vm614 = vcmask 1047556
    %v615 = vsel %vm614, %v613, %v611
    %616 = vrot.lane.b32.xlu0 %v615, 64
    %v617 = vpop.permute.xlu0 %616
    %vm618 = vcmask 785920
    %s619 = scalar_lea.vmem [#allocation0], 16
    %620 = vst.msk [vmem:[%s619] sm:$0xff] %vm618, %v617
    %s621 = scalar_lea.vmem [#allocation1], 194
    %v622 = vld [vmem:[%s621] ss:$8 sm:$0xf]
    %s623 = scalar_lea.vmem [#allocation1], 194
    %v624 = vld [vmem:[%s623] ss:$8 sm:$0xf0]
    %vm625 = vcmask 1047556
    %v626 = vsel %vm625, %v624, %v622
    %627 = vrot.lane.b32.xlu0 %v626, 64
    %v628 = vpop.permute.xlu0 %627
    %vm629 = vcmask 785920
    %s630 = scalar_lea.vmem [#allocation0], 24
    %631 = vst.msk [vmem:[%s630] sm:$0xff] %vm629, %v628
    %s632 = scalar_lea.vmem [#allocation1], 1
    %v633 = vld [vmem:[%s632] ss:$8 sm:$0xf]
    %s634 = scalar_lea.vmem [#allocation1], 1
    %v635 = vld [vmem:[%s634] ss:$8 sm:$0xf0]
    %vm636 = vcmask 1047556
    %v637 = vsel %vm636, %v635, %v633
    %638 = vrot.lane.b32.xlu0 %v637, 32
    %v639 = vpop.permute.xlu0 %638
    %vm640 = vcmask 523520
    %641 = vst.msk [vmem:[#allocation0] sm:$0xff] %vm640, %v639
    %s642 = scalar_lea.vmem [#allocation1], 65
    %v643 = vld [vmem:[%s642] ss:$8 sm:$0xf]
    %s644 = scalar_lea.vmem [#allocation1], 65
    %v645 = vld [vmem:[%s644] ss:$8 sm:$0xf0]
    %vm646 = vcmask 1047556
    %v647 = vsel %vm646, %v645, %v643
    %648 = vrot.lane.b32.xlu0 %v647, 32
    %v649 = vpop.permute.xlu0 %648
    %vm650 = vcmask 523520
    %s651 = scalar_lea.vmem [#allocation0], 8
    %652 = vst.msk [vmem:[%s651] sm:$0xff] %vm650, %v649
    %s653 = scalar_lea.vmem [#allocation1], 129
    %v654 = vld [vmem:[%s653] ss:$8 sm:$0xf]
    %s655 = scalar_lea.vmem [#allocation1], 129
    %v656 = vld [vmem:[%s655] ss:$8 sm:$0xf0]
    %vm657 = vcmask 1047556
    %v658 = vsel %vm657, %v656, %v654
    %659 = vrot.lane.b32.xlu0 %v658, 32
    %v660 = vpop.permute.xlu0 %659
    %vm661 = vcmask 523520
    %s662 = scalar_lea.vmem [#allocation0], 16
    %663 = vst.msk [vmem:[%s662] sm:$0xff] %vm661, %v660
    %s664 = scalar_lea.vmem [#allocation1], 193
    %v665 = vld [vmem:[%s664] ss:$8 sm:$0xf]
    %s666 = scalar_lea.vmem [#allocation1], 193
    %v667 = vld [vmem:[%s666] ss:$8 sm:$0xf0]
    %vm668 = vcmask 1047556
    %v669 = vsel %vm668, %v667, %v665
    %670 = vrot.lane.b32.xlu0 %v669, 32
    %v671 = vpop.permute.xlu0 %670
    %vm672 = vcmask 523520
    %s673 = scalar_lea.vmem [#allocation0], 24
    %674 = vst.msk [vmem:[%s673] sm:$0xff] %vm672, %v671
    %s676 = smul.u32 4, 2
    %s677 = sshllo.u32 0, %s676
    %s678 = sshrl.u32 %s676, 1
    %v679 = vld [vmem:[#allocation0] sm:%s677]
    %v680 = vpack.c.bf16 0.0, %v679
    %s681 = sshllo.u32 0, %s678
    %682 = vst [vmem:[%s1] sm:%s681] %v680
    %s683 = scalar_lea.vmem [#allocation0], 8
    %v684 = vld [vmem:[%s683] sm:%s677]
    %v685 = vpack.c.bf16 0.0, %v684
    %s686 = sshllo.u32 0, %s678
    %s687 = scalar_lea.vmem %s1, 4
    %688 = vst [vmem:[%s687] sm:%s686] %v685
    %s689 = scalar_lea.vmem [#allocation0], 16
    %v690 = vld [vmem:[%s689] sm:%s677]
    %v691 = vpack.c.bf16 0.0, %v690
    %s692 = sshllo.u32 0, %s678
    %s693 = smul.addr 4, 2
    %s694 = scalar_lea.vmem %s1, %s693
    %695 = vst [vmem:[%s694] sm:%s692] %v691
    %s696 = scalar_lea.vmem [#allocation0], 24
    %v697 = vld [vmem:[%s696] sm:%s677]
    %v698 = vpack.c.bf16 0.0, %v697
    %s699 = sshllo.u32 0, %s678
    %s700 = smul.addr 4, 3
    %s701 = scalar_lea.vmem %s1, %s700
    %702 = vst [vmem:[%s701] sm:%s699] %v698

// kernel: transformers_embedder_forward.1
$region0: #{transformers_embedder_forward.1}
  #allocation0 [shape = 'u32[]', space=smem, size = 0x4, offset = 0x4, fixed_abs, tag = 'smem constant byte address 0x4 - core index']
  #allocation1 [shape = 'u32[144,128]{1,0:T(1,128)}', space=vmem, size = 0x12000, scoped, tag = 'internal scratch']
  %s0 = inlined_call_operand.vmem [shape: f32[32,32], index: 0, kind: input, shape index: {}]
  %s1 = inlined_call_operand.vmem [shape: bf16[32,128], index: 1, kind: input, shape index: {}]
  %s2 = inlined_call_operand.vmem [shape: bf16[128,32], index: 2, kind: input, shape index: {}]
  %s3 = inlined_call_operand.vmem [shape: bf16[16,32], index: 3, kind: input, shape index: {}]
  %s4 = inlined_call_operand.vmem [shape: bf16[32,96], index: 4, kind: input, shape index: {}]
  %s5 = inlined_call_operand.vmem [shape: bf16[32,32], index: 5, kind: input, shape index: {}]
  %s6 = inlined_call_operand.vmem [shape: bf16[32,64], index: 6, kind: input, shape index: {}]
  %s7 = inlined_call_operand.vmem [shape: bf16[64,32], index: 7, kind: input, shape index: {}]
  %s8 = inlined_call_operand.vmem [shape: f32[8,96], index: 8, kind: input, shape index: {}]
  %s9 = inlined_call_operand.hbm [shape: f32[16,32], index: 9, kind: output, shape index: {}]
  %s10 = sld [smem:[#allocation0]]
  $region46: #{transformers_embedder_forward.1} parent=0
    _
  %s12 = ssub.s32 1, %s10
  %s13 = scalar_select 0, %s12, %s10
  $region1: #{transformers_embedder_forward.1} parent=0
    #allocation2 [shape = 'u8[8192]{0}', space=vmem, size = 0x2000, scoped, tag = 'output window, operand 0, single buffered']
    #allocation3 [shape = 's32[1]{0}', space=sflag, size = 0x4, scoped, tag = 'scoped memory for transformers_embedder_forward.1']
    %14 = vsyncpa [#allocation3], 0
    // Predicated region
    $region2: #{transformers_embedder_forward.1} parent=1 // pred_check
      _
    $region3: #{transformers_embedder_forward.1} parent=1 // pred_check_branch
      %16 = sbr.rel (0) target = $region5
    $region4: #{transformers_embedder_forward.1} parent=1 // pred_region
      _
    $region5: #{transformers_embedder_forward.1} parent=1 // pred_fallthru
      _
    // Predicated region
    $region6: #{transformers_embedder_forward.1} parent=1 // pred_check
      _
    $region7: #{transformers_embedder_forward.1} parent=1 // pred_check_branch
      %18 = sbr.rel (0) target = $region9
    $region8: #{transformers_embedder_forward.1} parent=1 // pred_region
      _
    $region9: #{transformers_embedder_forward.1} parent=1 // pred_fallthru
      _
    // Predicated region
    $region10: #{transformers_embedder_forward.1} parent=1 // pred_check
      _
    $region11: #{transformers_embedder_forward.1} parent=1 // pred_check_branch
      %20 = sbr.rel (0) target = $region13
    $region12: #{transformers_embedder_forward.1} parent=1 // pred_region
      _
    $region13: #{transformers_embedder_forward.1} parent=1 // pred_fallthru
      _
    // Predicated region
    $region14: #{transformers_embedder_forward.1} parent=1 // pred_check
      _
    $region15: #{transformers_embedder_forward.1} parent=1 // pred_check_branch
      %22 = sbr.rel (0) target = $region17
    $region16: #{transformers_embedder_forward.1} parent=1 // pred_region
      _
    $region17: #{transformers_embedder_forward.1} parent=1 // pred_fallthru
      _
    // Predicated region
    $region18: #{transformers_embedder_forward.1} parent=1 // pred_check
      _
    $region19: #{transformers_embedder_forward.1} parent=1 // pred_check_branch
      %24 = sbr.rel (0) target = $region21
    $region20: #{transformers_embedder_forward.1} parent=1 // pred_region
      _
    $region21: #{transformers_embedder_forward.1} parent=1 // pred_fallthru
      _
    // Predicated region
    $region22: #{transformers_embedder_forward.1} parent=1 // pred_check
      _
    $region23: #{transformers_embedder_forward.1} parent=1 // pred_check_branch
      %26 = sbr.rel (0) target = $region25
    $region24: #{transformers_embedder_forward.1} parent=1 // pred_region
      _
    $region25: #{transformers_embedder_forward.1} parent=1 // pred_fallthru
      _
    // Predicated region
    $region26: #{transformers_embedder_forward.1} parent=1 // pred_check
      _
    $region27: #{transformers_embedder_forward.1} parent=1 // pred_check_branch
      %28 = sbr.rel (0) target = $region29
    $region28: #{transformers_embedder_forward.1} parent=1 // pred_region
      _
    $region29: #{transformers_embedder_forward.1} parent=1 // pred_fallthru
      _
    // Predicated region
    $region30: #{transformers_embedder_forward.1} parent=1 // pred_check
      _
    $region31: #{transformers_embedder_forward.1} parent=1 // pred_check_branch
      %30 = sbr.rel (0) target = $region33
    $region32: #{transformers_embedder_forward.1} parent=1 // pred_region
      _
    $region33: #{transformers_embedder_forward.1} parent=1 // pred_fallthru
      _
    // Predicated region
    $region34: #{transformers_embedder_forward.1} parent=1 // pred_check
      _
    $region35: #{transformers_embedder_forward.1} parent=1 // pred_check_branch
      %32 = sbr.rel (0) target = $region37
    $region36: #{transformers_embedder_forward.1} parent=1 // pred_region
      _
    $region37: #{transformers_embedder_forward.1} parent=1 // pred_fallthru
      _
    %v34 = vld [vmem:[%s0] sm:$0xff]
    %v35 = vld [vmem:[%s0 + $0x8] sm:$0xff]
    %v36 = vld [vmem:[%s0 + $0x10] sm:$0xff]
    %v37 = vld [vmem:[%s0 + $0x18] sm:$0xff]
    %v38 = vpack.c.bf16 %v35, %v34
    %v39 = vpack.c.bf16 %v37, %v36
    %v40 = vld [vmem:[%s8] sm:$0xff]
    %v41 = vld [vmem:[%s4] sm:$0xf]
    %v42 = vld [vmem:[%s4 + $0x4] sm:$0xf]
    %v43 = vld [vmem:[%s4 + $0x8] sm:$0xf]
    %v44 = vld [vmem:[%s4 + $0xc] sm:$0xf]
    %v45 = vlaneseq
    %v46 = vshrl.u32 %v45, 7
    %v47 = vsub.s32 0, %v46
    %v48 = vrot.slane %v40, %v47
    %v53 = vunpack.c.l.b16 %v41
    %v54 = vunpack.c.l.b16 %v42
    %v55 = vunpack.c.l.b16 %v43
    %v56 = vunpack.c.l.b16 %v44
    %v57 = vpack.c.b16 %v54, %v53
    %v58 = vpack.c.b16 %v56, %v55
    %vm61 = vcmask 261120
    %v63 = vsel %vm61, %v38, 0
    %v66 = vsel %vm61, %v39, 0
    %68 = vmatprep.subr.bf16.mxu0 0
    %69 = vmatpush1.bf16.msra.mxu0 %v57
    %70 = vmatprep.subr.bf16.mxu0 0
    %71 = vmatpush1.bf16.msra.mxu0 %v58
    %72 = vmatprep.subr.bf16.mxu0 0
    %73 = vmatpush1.bf16.msra.mxu0 0
    %74 = vmatprep.subr.bf16.mxu0 0
    %75 = vmatpush1.bf16.msra.mxu0 0
    %76 = vmatprep.subr.bf16.mxu0 0
    %77 = vmatpush1.bf16.msra.mxu0 0
    %78 = vmatprep.subr.bf16.mxu0 0
    %79 = vmatpush1.bf16.msra.mxu0 0
    %80 = vmatprep.subr.bf16.mxu0 0
    %81 = vmatpush1.bf16.msra.mxu0 0
    %82 = vmatprep.subr.bf16.mxu0 0
    %83 = vmatpush1.bf16.msra.mxu0 0
    %84 = vmatprep.subr.bf16.mxu0 0
    %85 = vmatpush1.bf16.msra.mxu0 0
    %86 = vmatprep.subr.bf16.mxu0 0
    %87 = vmatpush1.bf16.msra.mxu0 0
    %88 = vmatprep.subr.bf16.mxu0 0
    %89 = vmatpush1.bf16.msra.mxu0 0
    %90 = vmatprep.subr.bf16.mxu0 0
    %91 = vmatpush1.bf16.msra.mxu0 0
    %92 = vmatprep.subr.bf16.mxu0 0
    %93 = vmatpush1.bf16.msra.mxu0 0
    %94 = vmatprep.subr.bf16.mxu0 0
    %95 = vmatpush1.bf16.msra.mxu0 0
    %96 = vmatprep.subr.bf16.mxu0 0
    %97 = vmatpush1.bf16.msra.mxu0 0
    %98 = vmatprep.subr.bf16.mxu0 0
    %99 = vmatpush1.bf16.msra.mxu0 0
    %100 = vmatprep.mubr.bf16.mxu0 0
    %101 = vmatmul.mubr.bf16.gmra.mrb[0].mxu0 %v63
    %v102 = vpop.f32.mrb[0].mxu0
    %v103 = vadd.f32 %v48, %v102
    %v104 = vpop.f32.mrb[0].mxu0
    %v105 = vpop.f32.mrb[0].mxu0
    %v106 = vadd.f32 %v48, %v105
    %v107 = vpop.f32.mrb[0].mxu0
    %108 = vmatprep.mubr.bf16.mxu0 0
    %109 = vmatmul.mubr.bf16.gmra.mrb[0].mxu0 %v66
    %v110 = vpop.f32.mrb[0].mxu0
    %v111 = vadd.f32 %v48, %v110
    %v112 = vpop.f32.mrb[0].mxu0
    %v113 = vpop.f32.mrb[0].mxu0
    %v114 = vadd.f32 %v48, %v113
    %v115 = vpop.f32.mrb[0].mxu0
    %116 = vdwg.mxu0
    %v117 = vpack.c.bf16 %v106, %v103
    %v118 = vpack.c.bf16 %v114, %v111
    %v119 = vld [vmem:[%s2] sm:$0xf]
    %v120 = vld [vmem:[%s2 + $0x4] sm:$0xf]
    %v121 = vld [vmem:[%s2 + $0x8] sm:$0xf]
    %v122 = vld [vmem:[%s2 + $0xc] sm:$0xf]
    %v123 = vld [vmem:[%s2 + $0x10] sm:$0xf]
    %v124 = vld [vmem:[%s2 + $0x14] sm:$0xf]
    %v125 = vld [vmem:[%s2 + $0x18] sm:$0xf]
    %v126 = vld [vmem:[%s2 + $0x1c] sm:$0xf]
    %v127 = vld [vmem:[%s2 + $0x20] sm:$0xf]
    %v128 = vld [vmem:[%s2 + $0x24] sm:$0xf]
    %v129 = vld [vmem:[%s2 + $0x28] sm:$0xf]
    %v130 = vld [vmem:[%s2 + $0x2c] sm:$0xf]
    %v131 = vld [vmem:[%s2 + $0x30] sm:$0xf]
    %v132 = vld [vmem:[%s2 + $0x34] sm:$0xf]
    %v133 = vld [vmem:[%s2 + $0x38] sm:$0xf]
    %v134 = vld [vmem:[%s2 + $0x3c] sm:$0xf]
    %v151 = vunpack.c.l.b16 %v119
    %v152 = vunpack.c.l.b16 %v120
    %v153 = vunpack.c.l.b16 %v121
    %v154 = vunpack.c.l.b16 %v122
    %v155 = vunpack.c.l.b16 %v123
    %v156 = vunpack.c.l.b16 %v124
    %v157 = vunpack.c.l.b16 %v125
    %v158 = vunpack.c.l.b16 %v126
    %v159 = vunpack.c.l.b16 %v127
    %v160 = vunpack.c.l.b16 %v128
    %v161 = vunpack.c.l.b16 %v129
    %v162 = vunpack.c.l.b16 %v130
    %v163 = vunpack.c.l.b16 %v131
    %v164 = vunpack.c.l.b16 %v132
    %v165 = vunpack.c.l.b16 %v133
    %v166 = vunpack.c.l.b16 %v134
    %v167 = vpack.c.b16 %v152, %v151
    %v168 = vpack.c.b16 %v154, %v153
    %v169 = vpack.c.b16 %v156, %v155
    %v170 = vpack.c.b16 %v158, %v157
    %v171 = vpack.c.b16 %v160, %v159
    %v172 = vpack.c.b16 %v162, %v161
    %v173 = vpack.c.b16 %v164, %v163
    %v174 = vpack.c.b16 %v166, %v165
    %175 = vrot.lane.b32.xlu0 %v167, 32
    %v176 = vpop.permute.xlu0 %175
    %177 = vrot.lane.b32.xlu0 %v168, 32
    %v178 = vpop.permute.xlu0 %177
    %179 = vrot.lane.b32.xlu0 %v169, 32
    %v180 = vpop.permute.xlu0 %179
    %181 = vrot.lane.b32.xlu0 %v170, 32
    %v182 = vpop.permute.xlu0 %181
    %183 = vrot.lane.b32.xlu0 %v171, 32
    %v184 = vpop.permute.xlu0 %183
    %185 = vrot.lane.b32.xlu0 %v172, 32
    %v186 = vpop.permute.xlu0 %185
    %187 = vrot.lane.b32.xlu0 %v173, 32
    %v188 = vpop.permute.xlu0 %187
    %189 = vrot.lane.b32.xlu0 %v174, 32
    %v190 = vpop.permute.xlu0 %189
    %v199 = vmul.bf16 %v117, %v176
    %v200 = vmul.bf16 %v118, %v178
    %v201 = vmul.bf16 %v117, %v180
    %v202 = vmul.bf16 %v118, %v182
    %v203 = vmul.bf16 %v117, %v184
    %v204 = vmul.bf16 %v118, %v186
    %v205 = vmul.bf16 %v117, %v188
    %v206 = vmul.bf16 %v118, %v190
    %207 = vrot.lane.b32.xlu0 %v167, 64
    %v208 = vpop.permute.xlu0 %207
    %209 = vrot.lane.b32.xlu0 %v168, 64
    %v210 = vpop.permute.xlu0 %209
    %211 = vrot.lane.b32.xlu0 %v169, 64
    %v212 = vpop.permute.xlu0 %211
    %213 = vrot.lane.b32.xlu0 %v170, 64
    %v214 = vpop.permute.xlu0 %213
    %215 = vrot.lane.b32.xlu0 %v171, 64
    %v216 = vpop.permute.xlu0 %215
    %217 = vrot.lane.b32.xlu0 %v172, 64
    %v218 = vpop.permute.xlu0 %217
    %219 = vrot.lane.b32.xlu0 %v173, 64
    %v220 = vpop.permute.xlu0 %219
    %221 = vrot.lane.b32.xlu0 %v174, 64
    %v222 = vpop.permute.xlu0 %221
    %v231 = vmul.bf16 %v117, %v208
    %v232 = vmul.bf16 %v118, %v210
    %v233 = vmul.bf16 %v117, %v212
    %v234 = vmul.bf16 %v118, %v214
    %v235 = vmul.bf16 %v117, %v216
    %v236 = vmul.bf16 %v118, %v218
    %v237 = vmul.bf16 %v117, %v220
    %v238 = vmul.bf16 %v118, %v222
    %247 = vrot.lane.b32.xlu0 %v199, 96
    %v248 = vpop.permute.xlu0 %247
    %249 = vrot.lane.b32.xlu0 %v200, 96
    %v250 = vpop.permute.xlu0 %249
    %251 = vrot.lane.b32.xlu0 %v201, 96
    %v252 = vpop.permute.xlu0 %251
    %253 = vrot.lane.b32.xlu0 %v202, 96
    %v254 = vpop.permute.xlu0 %253
    %255 = vrot.lane.b32.xlu0 %v203, 96
    %v256 = vpop.permute.xlu0 %255
    %257 = vrot.lane.b32.xlu0 %v204, 96
    %v258 = vpop.permute.xlu0 %257
    %259 = vrot.lane.b32.xlu0 %v205, 96
    %v260 = vpop.permute.xlu0 %259
    %261 = vrot.lane.b32.xlu0 %v206, 96
    %v262 = vpop.permute.xlu0 %261
    %v264 = vsel %vm61, %v117, 0
    %v267 = vsel %vm61, %v118, 0
    %v270 = vsel %vm61, %v248, 0
    %v273 = vsel %vm61, %v250, 0
    %v276 = vsel %vm61, %v252, 0
    %v279 = vsel %vm61, %v254, 0
    %v282 = vsel %vm61, %v256, 0
    %v285 = vsel %vm61, %v258, 0
    %v288 = vsel %vm61, %v260, 0
    %v291 = vsel %vm61, %v262, 0
    %293 = vmatprep.subr.bf16.mxu0 0
    %294 = vmatpush1.bf16.xpose.msra.mxu0 %v270
    %295 = vmatprep.subr.bf16.mxu0 0
    %296 = vmatpush1.bf16.xpose.msra.mxu0 %v273
    %297 = vmatprep.subr.bf16.mxu0 0
    %298 = vmatpush1.bf16.xpose.msra.mxu0 %v276
    %299 = vmatprep.subr.bf16.mxu0 0
    %300 = vmatpush1.bf16.xpose.msra.mxu0 %v279
    %301 = vmatprep.subr.bf16.mxu0 0
    %302 = vmatpush1.bf16.xpose.msra.mxu0 %v282
    %303 = vmatprep.subr.bf16.mxu0 0
    %304 = vmatpush1.bf16.xpose.msra.mxu0 %v285
    %305 = vmatprep.subr.bf16.mxu0 0
    %306 = vmatpush1.bf16.xpose.msra.mxu0 %v288
    %307 = vmatprep.subr.bf16.mxu0 0
    %308 = vmatpush1.bf16.xpose.msra.mxu0 %v291
    %309 = vmatprep.subr.bf16.mxu0 0
    %310 = vmatpush1.bf16.xpose.msra.mxu0 0
    %311 = vmatprep.subr.bf16.mxu0 0
    %312 = vmatpush1.bf16.xpose.msra.mxu0 0
    %313 = vmatprep.subr.bf16.mxu0 0
    %314 = vmatpush1.bf16.xpose.msra.mxu0 0
    %315 = vmatprep.subr.bf16.mxu0 0
    %316 = vmatpush1.bf16.xpose.msra.mxu0 0
    %317 = vmatprep.subr.bf16.mxu0 0
    %318 = vmatpush1.bf16.xpose.msra.mxu0 0
    %319 = vmatprep.subr.bf16.mxu0 0
    %320 = vmatpush1.bf16.xpose.msra.mxu0 0
    %321 = vmatprep.subr.bf16.mxu0 0
    %322 = vmatpush1.bf16.xpose.msra.mxu0 0
    %323 = vmatprep.subr.bf16.mxu0 0
    %324 = vmatpush1.bf16.xpose.msra.mxu0 0
    %325 = vmatprep.mubr.bf16.mxu0 0
    %326 = vmatmul.mubr.bf16.gmra.mrb[0].mxu0 %v264
    %v327 = vpop.f32.mrb[0].mxu0
    %v328 = vadd.f32 0.0, %v327
    %v329 = vpop.f32.mrb[0].mxu0
    %v330 = vpop.f32.mrb[0].mxu0
    %v331 = vadd.f32 0.0, %v330
    %v332 = vpop.f32.mrb[0].mxu0
    %333 = vmatprep.mubr.bf16.mxu0 0
    %334 = vmatmul.mubr.bf16.gmra.mrb[0].mxu0 %v267
    %v335 = vpop.f32.mrb[0].mxu0
    %v336 = vadd.f32 0.0, %v335
    %v337 = vpop.f32.mrb[0].mxu0
    %v338 = vpop.f32.mrb[0].mxu0
    %v339 = vadd.f32 0.0, %v338
    %v340 = vpop.f32.mrb[0].mxu0
    %341 = vdwg.mxu0
    %v342 = vmul.f32 %v328, 0.35355338
    %v343 = vmul.f32 %v331, 0.35355338
    %v344 = vmul.f32 %v336, 0.35355338
    %v345 = vmul.f32 %v339, 0.35355338
    %v346 = vmul.f32 %v342, 1.442695
    %v347 = vpow.pop %v346
    %v348 = vmul.f32 %v343, 1.442695
    %v349 = vpow.pop %v348
    %v350 = vmul.f32 %v344, 1.442695
    %v351 = vpow.pop %v350
    %v352 = vmul.f32 %v345, 1.442695
    %v353 = vpow.pop %v352
    %v354 = vld [vmem:[%s1] sm:$0xf]
    %v355 = vld [vmem:[%s1 + $0x4] sm:$0xf]
    %v356 = vld [vmem:[%s1 + $0x8] sm:$0xf]
    %v357 = vld [vmem:[%s1 + $0xc] sm:$0xf]
    %v358 = vunpack.c.l.bf16 %v354
    %v359 = vunpack.c.l.bf16 %v355
    %v360 = vunpack.c.l.bf16 %v356
    %v361 = vunpack.c.l.bf16 %v357
    %v362 = vmul.f32 %v347, %v358
    %v363 = vmul.f32 %v349, %v359
    %v364 = vmul.f32 %v351, %v360
    %v365 = vmul.f32 %v353, %v361
    %v366 = vpack.c.bf16 %v363, %v362
    %v367 = vpack.c.bf16 %v365, %v364
    %376 = vrot.lane.b32.xlu0 %v231, 64
    %v377 = vpop.permute.xlu0 %376
    %378 = vrot.lane.b32.xlu0 %v232, 64
    %v379 = vpop.permute.xlu0 %378
    %380 = vrot.lane.b32.xlu0 %v233, 64
    %v381 = vpop.permute.xlu0 %380
    %382 = vrot.lane.b32.xlu0 %v234, 64
    %v383 = vpop.permute.xlu0 %382
    %384 = vrot.lane.b32.xlu0 %v235, 64
    %v385 = vpop.permute.xlu0 %384
    %386 = vrot.lane.b32.xlu0 %v236, 64
    %v387 = vpop.permute.xlu0 %386
    %388 = vrot.lane.b32.xlu0 %v237, 64
    %v389 = vpop.permute.xlu0 %388
    %390 = vrot.lane.b32.xlu0 %v238, 64
    %v391 = vpop.permute.xlu0 %390
    %400 = vmatprep.subr.bf16.mxu0 0
    %401 = vmatpush1.bf16.msra.mxu0 %v377
    %402 = vmatprep.subr.bf16.mxu0 0
    %403 = vmatpush1.bf16.msra.mxu0 %v379
    %404 = vmatprep.subr.bf16.mxu0 0
    %405 = vmatpush1.bf16.msra.mxu0 %v381
    %406 = vmatprep.subr.bf16.mxu0 0
    %407 = vmatpush1.bf16.msra.mxu0 %v383
    %408 = vmatprep.subr.bf16.mxu0 0
    %409 = vmatpush1.bf16.msra.mxu0 %v385
    %410 = vmatprep.subr.bf16.mxu0 0
    %411 = vmatpush1.bf16.msra.mxu0 %v387
    %412 = vmatprep.subr.bf16.mxu0 0
    %413 = vmatpush1.bf16.msra.mxu0 %v389
    %414 = vmatprep.subr.bf16.mxu0 0
    %415 = vmatpush1.bf16.msra.mxu0 %v391
    %416 = vmatprep.subr.bf16.mxu0 0
    %417 = vmatpush1.bf16.msra.mxu0 0
    %418 = vmatprep.subr.bf16.mxu0 0
    %419 = vmatpush1.bf16.msra.mxu0 0
    %420 = vmatprep.subr.bf16.mxu0 0
    %421 = vmatpush1.bf16.msra.mxu0 0
    %422 = vmatprep.subr.bf16.mxu0 0
    %423 = vmatpush1.bf16.msra.mxu0 0
    %424 = vmatprep.subr.bf16.mxu0 0
    %425 = vmatpush1.bf16.msra.mxu0 0
    %426 = vmatprep.subr.bf16.mxu0 0
    %427 = vmatpush1.bf16.msra.mxu0 0
    %428 = vmatprep.subr.bf16.mxu0 0
    %429 = vmatpush1.bf16.msra.mxu0 0
    %430 = vmatprep.subr.bf16.mxu0 0
    %431 = vmatpush1.bf16.msra.mxu0 0
    %432 = vmatprep.mubr.bf16.mxu0 0
    %433 = vmatmul.mubr.bf16.gmra.mrb[0].mxu0 %v366
    %v434 = vpop.f32.mrb[0].mxu0
    %v435 = vadd.f32 0.0, %v434
    %v436 = vpop.f32.mrb[0].mxu0
    %v437 = vpop.f32.mrb[0].mxu0
    %v438 = vadd.f32 0.0, %v437
    %v439 = vpop.f32.mrb[0].mxu0
    %440 = vmatprep.mubr.bf16.mxu0 0
    %441 = vmatmul.mubr.bf16.gmra.mrb[0].mxu0 %v367
    %v442 = vpop.f32.mrb[0].mxu0
    %v443 = vadd.f32 0.0, %v442
    %v444 = vpop.f32.mrb[0].mxu0
    %v445 = vpop.f32.mrb[0].mxu0
    %v446 = vadd.f32 0.0, %v445
    %v447 = vpop.f32.mrb[0].mxu0
    %448 = vdwg.mxu0
    %457 = vmatprep.subr.bf16.mxu0 0
    %458 = vmatpush1.bf16.msra.mxu0 %v167
    %459 = vmatprep.subr.bf16.mxu0 0
    %460 = vmatpush1.bf16.msra.mxu0 %v168
    %461 = vmatprep.subr.bf16.mxu0 0
    %462 = vmatpush1.bf16.msra.mxu0 %v169
    %463 = vmatprep.subr.bf16.mxu0 0
    %464 = vmatpush1.bf16.msra.mxu0 %v170
    %465 = vmatprep.subr.bf16.mxu0 0
    %466 = vmatpush1.bf16.msra.mxu0 %v171
    %467 = vmatprep.subr.bf16.mxu0 0
    %468 = vmatpush1.bf16.msra.mxu0 %v172
    %469 = vmatprep.subr.bf16.mxu0 0
    %470 = vmatpush1.bf16.msra.mxu0 %v173
    %471 = vmatprep.subr.bf16.mxu0 0
    %472 = vmatpush1.bf16.msra.mxu0 %v174
    %473 = vmatprep.subr.bf16.mxu0 0
    %474 = vmatpush1.bf16.msra.mxu0 0
    %475 = vmatprep.subr.bf16.mxu0 0
    %476 = vmatpush1.bf16.msra.mxu0 0
    %477 = vmatprep.subr.bf16.mxu0 0
    %478 = vmatpush1.bf16.msra.mxu0 0
    %479 = vmatprep.subr.bf16.mxu0 0
    %480 = vmatpush1.bf16.msra.mxu0 0
    %481 = vmatprep.subr.bf16.mxu0 0
    %482 = vmatpush1.bf16.msra.mxu0 0
    %483 = vmatprep.subr.bf16.mxu0 0
    %484 = vmatpush1.bf16.msra.mxu0 0
    %485 = vmatprep.subr.bf16.mxu0 0
    %486 = vmatpush1.bf16.msra.mxu0 0
    %487 = vmatprep.subr.bf16.mxu0 0
    %488 = vmatpush1.bf16.msra.mxu0 0
    %489 = vmatprep.mubr.bf16.mxu0 0
    %490 = vmatmul.mubr.bf16.gmra.mrb[0].mxu0 %v366
    %v491 = vpop.f32.mrb[0].mxu0
    %v492 = vadd.f32 0.0, %v491
    %v493 = vpop.f32.mrb[0].mxu0
    %v494 = vpop.f32.mrb[0].mxu0
    %v495 = vadd.f32 0.0, %v494
    %v496 = vpop.f32.mrb[0].mxu0
    %497 = vmatprep.mubr.bf16.mxu0 0
    %498 = vmatmul.mubr.bf16.gmra.mrb[0].mxu0 %v367
    %v499 = vpop.f32.mrb[0].mxu0
    %v500 = vadd.f32 0.0, %v499
    %v501 = vpop.f32.mrb[0].mxu0
    %v502 = vpop.f32.mrb[0].mxu0
    %v503 = vadd.f32 0.0, %v502
    %v504 = vpop.f32.mrb[0].mxu0
    %505 = vdwg.mxu0
    %v506 = vrcp.pop %v492
    %v507 = vrcp.pop %v495
    %v508 = vrcp.pop %v500
    %v509 = vrcp.pop %v503
    %v510 = vmul.f32 %v435, %v506
    %v511 = vmul.f32 %v438, %v507
    %v512 = vmul.f32 %v443, %v508
    %v513 = vmul.f32 %v446, %v509
    %v514 = vpack.c.bf16 %v511, %v510
    %v515 = vpack.c.bf16 %v513, %v512
    %v516 = vld [vmem:[%s5] sm:$0xf]
    %v517 = vld [vmem:[%s5 + $0x4] sm:$0xf]
    %v518 = vld [vmem:[%s5 + $0x8] sm:$0xf]
    %v519 = vld [vmem:[%s5 + $0xc] sm:$0xf]
    %v520 = vlaneseq
    %v521 = vshrl.u32 %v520, 7
    %v522 = vsub.s32 2, %v521
    %v523 = vrot.slane %v40, %v522
    %v528 = vunpack.c.l.b16 %v516
    %v529 = vunpack.c.l.b16 %v517
    %v530 = vunpack.c.l.b16 %v518
    %v531 = vunpack.c.l.b16 %v519
    %v532 = vpack.c.b16 %v529, %v528
    %v533 = vpack.c.b16 %v531, %v530
    %v537 = vsel %vm61, %v514, 0
    %v540 = vsel %vm61, %v515, 0
    %542 = vmatprep.subr.bf16.mxu0 0
    %543 = vmatpush1.bf16.msra.mxu0 %v532
    %544 = vmatprep.subr.bf16.mxu0 0
    %545 = vmatpush1.bf16.msra.mxu0 %v533
    %546 = vmatprep.subr.bf16.mxu0 0
    %547 = vmatpush1.bf16.msra.mxu0 0
    %548 = vmatprep.subr.bf16.mxu0 0
    %549 = vmatpush1.bf16.msra.mxu0 0
    %550 = vmatprep.subr.bf16.mxu0 0
    %551 = vmatpush1.bf16.msra.mxu0 0
    %552 = vmatprep.subr.bf16.mxu0 0
    %553 = vmatpush1.bf16.msra.mxu0 0
    %554 = vmatprep.subr.bf16.mxu0 0
    %555 = vmatpush1.bf16.msra.mxu0 0
    %556 = vmatprep.subr.bf16.mxu0 0
    %557 = vmatpush1.bf16.msra.mxu0 0
    %558 = vmatprep.subr.bf16.mxu0 0
    %559 = vmatpush1.bf16.msra.mxu0 0
    %560 = vmatprep.subr.bf16.mxu0 0
    %561 = vmatpush1.bf16.msra.mxu0 0
    %562 = vmatprep.subr.bf16.mxu0 0
    %563 = vmatpush1.bf16.msra.mxu0 0
    %564 = vmatprep.subr.bf16.mxu0 0
    %565 = vmatpush1.bf16.msra.mxu0 0
    %566 = vmatprep.subr.bf16.mxu0 0
    %567 = vmatpush1.bf16.msra.mxu0 0
    %568 = vmatprep.subr.bf16.mxu0 0
    %569 = vmatpush1.bf16.msra.mxu0 0
    %570 = vmatprep.subr.bf16.mxu0 0
    %571 = vmatpush1.bf16.msra.mxu0 0
    %572 = vmatprep.subr.bf16.mxu0 0
    %573 = vmatpush1.bf16.msra.mxu0 0
    %574 = vmatprep.mubr.bf16.mxu0 0
    %575 = vmatmul.mubr.bf16.gmra.mrb[0].mxu0 %v537
    %v576 = vpop.f32.mrb[0].mxu0
    %v577 = vadd.f32 %v523, %v576
    %v578 = vpop.f32.mrb[0].mxu0
    %v579 = vpop.f32.mrb[0].mxu0
    %v580 = vadd.f32 %v523, %v579
    %v581 = vpop.f32.mrb[0].mxu0
    %582 = vmatprep.mubr.bf16.mxu0 0
    %583 = vmatmul.mubr.bf16.gmra.mrb[0].mxu0 %v540
    %v584 = vpop.f32.mrb[0].mxu0
    %v585 = vadd.f32 %v523, %v584
    %v586 = vpop.f32.mrb[0].mxu0
    %v587 = vpop.f32.mrb[0].mxu0
    %v588 = vadd.f32 %v523, %v587
    %v589 = vpop.f32.mrb[0].mxu0
    %590 = vdwg.mxu0
    %v591 = vadd.f32 %v34, %v577
    %v592 = vadd.f32 %v35, %v580
    %v593 = vadd.f32 %v36, %v585
    %v594 = vadd.f32 %v37, %v588
    %v595 = vsel %vm61, %v591, 0.0
    %596 = vadd.xlane.f32.xlu0 %v595
    %v597 = vpop.xlane.xlu0 %596
    %v598 = vsel %vm61, %v592, 0.0
    %599 = vadd.xlane.f32.xlu0 %v598
    %v600 = vpop.xlane.xlu0 %599
    %v601 = vsel %vm61, %v593, 0.0
    %602 = vadd.xlane.f32.xlu0 %v601
    %v603 = vpop.xlane.xlu0 %602
    %v604 = vsel %vm61, %v594, 0.0
    %605 = vadd.xlane.f32.xlu0 %v604
    %v606 = vpop.xlane.xlu0 %605
    %v607 = vrcp.pop 32.0
    %v608 = vmul.f32 %v597, %v607
    %v609 = vmul.f32 %v600, %v607
    %v610 = vmul.f32 %v603, %v607
    %v611 = vmul.f32 %v606, %v607
    %v612 = vsub.f32 %v591, %v608
    %v613 = vsub.f32 %v592, %v609
    %v614 = vsub.f32 %v593, %v610
    %v615 = vsub.f32 %v594, %v611
    %v616 = vmul.f32 %v612, %v612
    %v617 = vmul.f32 %v613, %v613
    %v618 = vmul.f32 %v614, %v614
    %v619 = vmul.f32 %v615, %v615
    %v620 = vsel %vm61, %v616, 0.0
    %621 = vadd.xlane.f32.xlu0 %v620
    %v622 = vpop.xlane.xlu0 %621
    %v623 = vsel %vm61, %v617, 0.0
    %624 = vadd.xlane.f32.xlu0 %v623
    %v625 = vpop.xlane.xlu0 %624
    %v626 = vsel %vm61, %v618, 0.0
    %627 = vadd.xlane.f32.xlu0 %v626
    %v628 = vpop.xlane.xlu0 %627
    %v629 = vsel %vm61, %v619, 0.0
    %630 = vadd.xlane.f32.xlu0 %v629
    %v631 = vpop.xlane.xlu0 %630
    %v632 = vmul.f32 %v622, %v607
    %v633 = vmul.f32 %v625, %v607
    %v634 = vmul.f32 %v628, %v607
    %v635 = vmul.f32 %v631, %v607
    %v636 = vadd.f32 %v632, 1e-12
    %v637 = vadd.f32 %v633, 1e-12
    %v638 = vadd.f32 %v634, 1e-12
    %v639 = vadd.f32 %v635, 1e-12
    %v640 = vrsqrt.pop %v636
    %v641 = vrsqrt.pop %v637
    %v642 = vrsqrt.pop %v638
    %v643 = vrsqrt.pop %v639
    %v644 = vmul.f32 %v612, %v640
    %v645 = vmul.f32 %v613, %v641
    %v646 = vmul.f32 %v614, %v642
    %v647 = vmul.f32 %v615, %v643
    %v648 = vlaneseq
    %v649 = vshrl.u32 %v648, 7
    %v650 = vsub.s32 3, %v649
    %v651 = vrot.slane %v40, %v650
    %v652 = vmul.f32 %v644, %v651
    %v653 = vmul.f32 %v645, %v651
    %v654 = vmul.f32 %v646, %v651
    %v655 = vmul.f32 %v647, %v651
    %v656 = vlaneseq
    %v657 = vshrl.u32 %v656, 7
    %v658 = vsub.s32 4, %v657
    %v659 = vrot.slane %v40, %v658
    %v660 = vadd.f32 %v652, %v659
    %v661 = vadd.f32 %v653, %v659
    %v662 = vadd.f32 %v654, %v659
    %v663 = vadd.f32 %v655, %v659
    %v664 = vpack.c.bf16 %v661, %v660
    %v665 = vpack.c.bf16 %v663, %v662
    %v666 = vld [vmem:[%s6] sm:$0xf]
    %v667 = vld [vmem:[%s6 + $0x4] sm:$0xf]
    %v668 = vld [vmem:[%s6 + $0x8] sm:$0xf]
    %v669 = vld [vmem:[%s6 + $0xc] sm:$0xf]
    %v670 = vlaneseq
    %v671 = vshrl.u32 %v670, 7
    %v672 = vsub.s32 1, %v671
    %v673 = vrot.slane %v40, %v672
    %v678 = vunpack.c.l.b16 %v666
    %v679 = vunpack.c.l.b16 %v667
    %v680 = vunpack.c.l.b16 %v668
    %v681 = vunpack.c.l.b16 %v669
    %v682 = vpack.c.b16 %v679, %v678
    %v683 = vpack.c.b16 %v681, %v680
    %v687 = vsel %vm61, %v664, 0
    %v690 = vsel %vm61, %v665, 0
    %692 = vmatprep.subr.bf16.mxu0 0
    %693 = vmatpush1.bf16.msra.mxu0 %v682
    %694 = vmatprep.subr.bf16.mxu0 0
    %695 = vmatpush1.bf16.msra.mxu0 %v683
    %696 = vmatprep.subr.bf16.mxu0 0
    %697 = vmatpush1.bf16.msra.mxu0 0
    %698 = vmatprep.subr.bf16.mxu0 0
    %699 = vmatpush1.bf16.msra.mxu0 0
    %700 = vmatprep.subr.bf16.mxu0 0
    %701 = vmatpush1.bf16.msra.mxu0 0
    %702 = vmatprep.subr.bf16.mxu0 0
    %703 = vmatpush1.bf16.msra.mxu0 0
    %704 = vmatprep.subr.bf16.mxu0 0
    %705 = vmatpush1.bf16.msra.mxu0 0
    %706 = vmatprep.subr.bf16.mxu0 0
    %707 = vmatpush1.bf16.msra.mxu0 0
    %708 = vmatprep.subr.bf16.mxu0 0
    %709 = vmatpush1.bf16.msra.mxu0 0
    %710 = vmatprep.subr.bf16.mxu0 0
    %711 = vmatpush1.bf16.msra.mxu0 0
    %712 = vmatprep.subr.bf16.mxu0 0
    %713 = vmatpush1.bf16.msra.mxu0 0
    %714 = vmatprep.subr.bf16.mxu0 0
    %715 = vmatpush1.bf16.msra.mxu0 0
    %716 = vmatprep.subr.bf16.mxu0 0
    %717 = vmatpush1.bf16.msra.mxu0 0
    %718 = vmatprep.subr.bf16.mxu0 0
    %719 = vmatpush1.bf16.msra.mxu0 0
    %720 = vmatprep.subr.bf16.mxu0 0
    %721 = vmatpush1.bf16.msra.mxu0 0
    %722 = vmatprep.subr.bf16.mxu0 0
    %723 = vmatpush1.bf16.msra.mxu0 0
    %724 = vmatprep.mubr.bf16.mxu0 0
    %725 = vmatmul.mubr.bf16.gmra.mrb[0].mxu0 %v687
    %v726 = vpop.f32.mrb[0].mxu0
    %v727 = vadd.f32 %v673, %v726
    %v728 = vpop.f32.mrb[0].mxu0
    %v729 = vpop.f32.mrb[0].mxu0
    %v730 = vadd.f32 %v673, %v729
    %v731 = vpop.f32.mrb[0].mxu0
    %732 = vmatprep.mubr.bf16.mxu0 0
    %733 = vmatmul.mubr.bf16.gmra.mrb[0].mxu0 %v690
    %v734 = vpop.f32.mrb[0].mxu0
    %v735 = vadd.f32 %v673, %v734
    %v736 = vpop.f32.mrb[0].mxu0
    %v737 = vpop.f32.mrb[0].mxu0
    %v738 = vadd.f32 %v673, %v737
    %v739 = vpop.f32.mrb[0].mxu0
    %740 = vdwg.mxu0
    %v741 = vmul.f32 %v727, %v727
    %v742 = vmul.f32 %v730, %v730
    %v743 = vmul.f32 %v735, %v735
    %v744 = vmul.f32 %v738, %v738
    %v745 = vmul.f32 %v727, %v741
    %v746 = vmul.f32 %v730, %v742
    %v747 = vmul.f32 %v735, %v743
    %v748 = vmul.f32 %v738, %v744
    %v749 = vmul.f32 %v745, 0.044715
    %v750 = vmul.f32 %v746, 0.044715
    %v751 = vmul.f32 %v747, 0.044715
    %v752 = vmul.f32 %v748, 0.044715
    %v753 = vadd.f32 %v727, %v749
    %v754 = vadd.f32 %v730, %v750
    %v755 = vadd.f32 %v735, %v751
    %v756 = vadd.f32 %v738, %v752
    %v757 = vmul.f32 %v753, 0.7978846
    %v758 = vmul.f32 %v754, 0.7978846
    %v759 = vmul.f32 %v755, 0.7978846
    %v760 = vmul.f32 %v756, 0.7978846
    %v761 = vtanh.pop %v757
    %v762 = vtanh.pop %v758
    %v763 = vtanh.pop %v759
    %v764 = vtanh.pop %v760
    %v765 = vadd.f32 %v761, 1.0
    %v766 = vadd.f32 %v762, 1.0
    %v767 = vadd.f32 %v763, 1.0
    %v768 = vadd.f32 %v764, 1.0
    %v769 = vmul.f32 %v765, 0.5
    %v770 = vmul.f32 %v766, 0.5
    %v771 = vmul.f32 %v767, 0.5
    %v772 = vmul.f32 %v768, 0.5
    %v773 = vmul.f32 %v727, %v769
    %v774 = vmul.f32 %v730, %v770
    %v775 = vmul.f32 %v735, %v771
    %v776 = vmul.f32 %v738, %v772
    %v777 = vpack.c.bf16 %v774, %v773
    %v778 = vpack.c.bf16 %v776, %v775
    %v779 = vld [vmem:[%s7] sm:$0xf]
    %v780 = vld [vmem:[%s7 + $0x4] sm:$0xf]
    %v781 = vld [vmem:[%s7 + $0x8] sm:$0xf]
    %v782 = vld [vmem:[%s7 + $0xc] sm:$0xf]
    %v783 = vld [vmem:[%s7 + $0x10] sm:$0xf]
    %v784 = vld [vmem:[%s7 + $0x14] sm:$0xf]
    %v785 = vld [vmem:[%s7 + $0x18] sm:$0xf]
    %v786 = vld [vmem:[%s7 + $0x1c] sm:$0xf]
    %v787 = vlaneseq
    %v788 = vshrl.u32 %v787, 7
    %v789 = vsub.s32 5, %v788
    %v790 = vrot.slane %v40, %v789
    %v799 = vunpack.c.l.b16 %v779
    %v800 = vunpack.c.l.b16 %v780
    %v801 = vunpack.c.l.b16 %v781
    %v802 = vunpack.c.l.b16 %v782
    %v803 = vunpack.c.l.b16 %v783
    %v804 = vunpack.c.l.b16 %v784
    %v805 = vunpack.c.l.b16 %v785
    %v806 = vunpack.c.l.b16 %v786
    %v807 = vpack.c.b16 %v800, %v799
    %v808 = vpack.c.b16 %v802, %v801
    %v809 = vpack.c.b16 %v804, %v803
    %v810 = vpack.c.b16 %v806, %v805
    %vm815 = vcmask 523264
    %v817 = vsel %vm815, %v777, 0
    %v820 = vsel %vm815, %v778, 0
    %822 = vmatprep.subr.bf16.mxu0 0
    %823 = vmatpush1.bf16.msra.mxu0 %v807
    %824 = vmatprep.subr.bf16.mxu0 0
    %825 = vmatpush1.bf16.msra.mxu0 %v808
    %826 = vmatprep.subr.bf16.mxu0 0
    %827 = vmatpush1.bf16.msra.mxu0 %v809
    %828 = vmatprep.subr.bf16.mxu0 0
    %829 = vmatpush1.bf16.msra.mxu0 %v810
    %830 = vmatprep.subr.bf16.mxu0 0
    %831 = vmatpush1.bf16.msra.mxu0 0
    %832 = vmatprep.subr.bf16.mxu0 0
    %833 = vmatpush1.bf16.msra.mxu0 0
    %834 = vmatprep.subr.bf16.mxu0 0
    %835 = vmatpush1.bf16.msra.mxu0 0
    %836 = vmatprep.subr.bf16.mxu0 0
    %837 = vmatpush1.bf16.msra.mxu0 0
    %838 = vmatprep.subr.bf16.mxu0 0
    %839 = vmatpush1.bf16.msra.mxu0 0
    %840 = vmatprep.subr.bf16.mxu0 0
    %841 = vmatpush1.bf16.msra.mxu0 0
    %842 = vmatprep.subr.bf16.mxu0 0
    %843 = vmatpush1.bf16.msra.mxu0 0
    %844 = vmatprep.subr.bf16.mxu0 0
    %845 = vmatpush1.bf16.msra.mxu0 0
    %846 = vmatprep.subr.bf16.mxu0 0
    %847 = vmatpush1.bf16.msra.mxu0 0
    %848 = vmatprep.subr.bf16.mxu0 0
    %849 = vmatpush1.bf16.msra.mxu0 0
    %850 = vmatprep.subr.bf16.mxu0 0
    %851 = vmatpush1.bf16.msra.mxu0 0
    %852 = vmatprep.subr.bf16.mxu0 0
    %853 = vmatpush1.bf16.msra.mxu0 0
    %854 = vmatprep.mubr.bf16.mxu0 0
    %855 = vmatmul.mubr.bf16.gmra.mrb[0].mxu0 %v817
    %v856 = vpop.f32.mrb[0].mxu0
    %v857 = vadd.f32 %v790, %v856
    %v858 = vpop.f32.mrb[0].mxu0
    %v859 = vpop.f32.mrb[0].mxu0
    %v860 = vadd.f32 %v790, %v859
    %v861 = vpop.f32.mrb[0].mxu0
    %862 = vmatprep.mubr.bf16.mxu0 0
    %863 = vmatmul.mubr.bf16.gmra.mrb[0].mxu0 %v820
    %v864 = vpop.f32.mrb[0].mxu0
    %v865 = vadd.f32 %v790, %v864
    %v866 = vpop.f32.mrb[0].mxu0
    %v867 = vpop.f32.mrb[0].mxu0
    %v868 = vadd.f32 %v790, %v867
    %v869 = vpop.f32.mrb[0].mxu0
    %870 = vdwg.mxu0
    %v871 = vadd.f32 %v660, %v857
    %v872 = vadd.f32 %v661, %v860
    %v873 = vadd.f32 %v662, %v865
    %v874 = vadd.f32 %v663, %v868
    %v875 = vsel %vm61, %v871, 0.0
    %876 = vadd.xlane.f32.xlu0 %v875
    %v877 = vpop.xlane.xlu0 %876
    %v878 = vsel %vm61, %v872, 0.0
    %879 = vadd.xlane.f32.xlu0 %v878
    %v880 = vpop.xlane.xlu0 %879
    %v881 = vsel %vm61, %v873, 0.0
    %882 = vadd.xlane.f32.xlu0 %v881
    %v883 = vpop.xlane.xlu0 %882
    %v884 = vsel %vm61, %v874, 0.0
    %885 = vadd.xlane.f32.xlu0 %v884
    %v886 = vpop.xlane.xlu0 %885
    %v887 = vmul.f32 %v877, %v607
    %v888 = vmul.f32 %v880, %v607
    %v889 = vmul.f32 %v883, %v607
    %v890 = vmul.f32 %v886, %v607
    %v891 = vsub.f32 %v871, %v887
    %v892 = vsub.f32 %v872, %v888
    %v893 = vsub.f32 %v873, %v889
    %v894 = vsub.f32 %v874, %v890
    %v895 = vmul.f32 %v891, %v891
    %v896 = vmul.f32 %v892, %v892
    %v897 = vmul.f32 %v893, %v893
    %v898 = vmul.f32 %v894, %v894
    %v899 = vsel %vm61, %v895, 0.0
    %900 = vadd.xlane.f32.xlu0 %v899
    %v901 = vpop.xlane.xlu0 %900
    %v902 = vsel %vm61, %v896, 0.0
    %903 = vadd.xlane.f32.xlu0 %v902
    %v904 = vpop.xlane.xlu0 %903
    %v905 = vsel %vm61, %v897, 0.0
    %906 = vadd.xlane.f32.xlu0 %v905
    %v907 = vpop.xlane.xlu0 %906
    %v908 = vsel %vm61, %v898, 0.0
    %909 = vadd.xlane.f32.xlu0 %v908
    %v910 = vpop.xlane.xlu0 %909
    %v911 = vmul.f32 %v901, %v607
    %v912 = vmul.f32 %v904, %v607
    %v913 = vmul.f32 %v907, %v607
    %v914 = vmul.f32 %v910, %v607
    %v915 = vadd.f32 %v911, 1e-12
    %v916 = vadd.f32 %v912, 1e-12
    %v917 = vadd.f32 %v913, 1e-12
    %v918 = vadd.f32 %v914, 1e-12
    %v919 = vrsqrt.pop %v915
    %v920 = vrsqrt.pop %v916
    %v921 = vrsqrt.pop %v917
    %v922 = vrsqrt.pop %v918
    %v923 = vmul.f32 %v891, %v919
    %v924 = vmul.f32 %v892, %v920
    %v925 = vmul.f32 %v893, %v921
    %v926 = vmul.f32 %v894, %v922
    %v927 = vlaneseq
    %v928 = vshrl.u32 %v927, 7
    %v929 = vsub.s32 6, %v928
    %v930 = vrot.slane %v40, %v929
    %v931 = vmul.f32 %v923, %v930
    %v932 = vmul.f32 %v924, %v930
    %v933 = vmul.f32 %v925, %v930
    %v934 = vmul.f32 %v926, %v930
    %v935 = vlaneseq
    %v936 = vshrl.u32 %v935, 7
    %v937 = vsub.s32 7, %v936
    %v938 = vrot.slane %v40, %v937
    %v939 = vadd.f32 %v931, %v938
    %v940 = vadd.f32 %v932, %v938
    %v941 = vadd.f32 %v933, %v938
    %v942 = vadd.f32 %v934, %v938
    %v943 = vld [vmem:[%s3] sm:$0xf]
    %v944 = vld [vmem:[%s3 + $0x4] sm:$0xf]
    %v945 = vpack.c.bf16 %v940, %v939
    %v946 = vpack.c.bf16 %v942, %v941
    %v949 = vunpack.c.l.b16 %v943
    %v950 = vunpack.c.l.b16 %v944
    %v951 = vpack.c.b16 %v950, %v949
    %v953 = vsel %vm61, %v951, 0
    %955 = vmatprep.subr.bf16.mxu0 0
    %956 = vmatpush1.bf16.msra.mxu0 %v945
    %957 = vmatprep.subr.bf16.mxu0 0
    %958 = vmatpush1.bf16.msra.mxu0 %v946
    %959 = vmatprep.subr.bf16.mxu0 0
    %960 = vmatpush1.bf16.msra.mxu0 0
    %961 = vmatprep.subr.bf16.mxu0 0
    %962 = vmatpush1.bf16.msra.mxu0 0
    %963 = vmatprep.subr.bf16.mxu0 0
    %964 = vmatpush1.bf16.msra.mxu0 0
    %965 = vmatprep.subr.bf16.mxu0 0
    %966 = vmatpush1.bf16.msra.mxu0 0
    %967 = vmatprep.subr.bf16.mxu0 0
    %968 = vmatpush1.bf16.msra.mxu0 0
    %969 = vmatprep.subr.bf16.mxu0 0
    %970 = vmatpush1.bf16.msra.mxu0 0
    %971 = vmatprep.subr.bf16.mxu0 0
    %972 = vmatpush1.bf16.msra.mxu0 0
    %973 = vmatprep.subr.bf16.mxu0 0
    %974 = vmatpush1.bf16.msra.mxu0 0
    %975 = vmatprep.subr.bf16.mxu0 0
    %976 = vmatpush1.bf16.msra.mxu0 0
    %977 = vmatprep.subr.bf16.mxu0 0
    %978 = vmatpush1.bf16.msra.mxu0 0
    %979 = vmatprep.subr.bf16.mxu0 0
    %980 = vmatpush1.bf16.msra.mxu0 0
    %981 = vmatprep.subr.bf16.mxu0 0
    %982 = vmatpush1.bf16.msra.mxu0 0
    %983 = vmatprep.subr.bf16.mxu0 0
    %984 = vmatpush1.bf16.msra.mxu0 0
    %985 = vmatprep.subr.bf16.mxu0 0
    %986 = vmatpush1.bf16.msra.mxu0 0
    %987 = vmatprep.mubr.bf16.mxu0 0
    %988 = vmatmul.mubr.bf16.gmra.mrb[0].mxu0 %v953
    %v989 = vpop.f32.mrb[0].mxu0
    %v990 = vadd.f32 0.0, %v989
    %v991 = vpop.f32.mrb[0].mxu0
    %v992 = vpop.f32.mrb[0].mxu0
    %v993 = vadd.f32 0.0, %v992
    %v994 = vpop.f32.mrb[0].mxu0
    %995 = vdwg.mxu0
    %996 = vst.msk [vmem:[#allocation2] sm:$0xff] %vm61, %v990
    %997 = vst.msk [vmem:[#allocation2 + $0x8] sm:$0xff] %vm61, %v993
    // Predicated region
    $region38: #{transformers_embedder_forward.1} parent=1 // pred_check
      _
    $region39: #{transformers_embedder_forward.1} parent=1 // pred_check_branch
      %999 = sbr.rel (0) target = $region41
    $region40: #{transformers_embedder_forward.1} parent=1 // pred_region
      %s1001 = ssub.s32 256, 256
      %1002 = vsyncadd [#allocation3], %s1001
      %s1003 = sshll.u32 [#allocation2], 4
      %s1004 = int_to_ptr.vmem [resolvable:$true] %s1003
      %1009 = dma.vmem_to_hbm [thread:$0]  %s1004, 256, %s9, [#allocation3], 128, 128, 8
    $region41: #{transformers_embedder_forward.1} parent=1 // pred_fallthru
      _
    // Predicated region
    $region42: #{transformers_embedder_forward.1} parent=1 // pred_check
      _
    $region43: #{transformers_embedder_forward.1} parent=1 // pred_check_branch
      %1011 = sbr.rel (0) target = $region45
    $region44: #{transformers_embedder_forward.1} parent=1 // pred_region
      %1012 = dma.done [#allocation3], 256
    $region45: #{transformers_embedder_forward.1} parent=1 // pred_fallthru
      _
    %1013 = vsyncpa [#allocation3], 1

</llo_original>
